<compile_context>
chip_gen: v7x
topology: tpu7x:2x2x1
jax: 0.10.0
libtpu: 0.0.40
codegen_flags: <defaults>
</compile_context>

<pallas_src>
import functools

import jax
import jax.numpy as jnp
import numpy as np
from jax.experimental import pallas as pl
from jax.experimental.pallas import tpu as pltpu

SIZE_DIVISIBILITY = 16  # synthetic backbone.size_divisibility
CP = 8                  # channel axis padded to 8 sublanes


def _round_up(v, m):
    return ((v + m - 1) // m) * m


def _pick_images_per_step(batch):
    """Batch images per grid step (amortize ~0.35us/step), keep >=2 steps for v7x."""
    ipb = max(1, min(batch // 2, 8))
    while batch % ipb:
        ipb -= 1
    return ipb


# ---------------------------------------------------------------------------
# Fused kernel: normalize + ImageList zero-pad + 3x3 conv stem (implicit
# im2col via a flat halo scratch -> single stacked K=72 bf16 matmul) + ReLU
# + 1x1 objectness head.  One grid step == `imgs_per_step` images.
# ---------------------------------------------------------------------------
def _offline_ae_fused_kernel(scale_ref, shiftm_ref, lmask_ref, rmask_ref,
                             img_ref, ws_ref, bs_ref, wo_ref, bo_ref,
                             xn_ref, feat_ref, obj_ref,
                             xpad_ref, stack_ref, *, Hp, Wp):
    ipb, C, H, W = img_ref.shape     # raw (unpadded) image block, NCHW slice
    Cp = xn_ref.shape[1]
    HpWp = Hp * Wp
    base = 1 + Wp                    # flat-halo offset of padded row 0, col 0

    # Cheap per-step clears (few KiB).  Needed so spatial/channel padding stays
    # zero; kept per-step (not first-step-only) so any grid->core split is safe.
    xpad_ref[...] = jnp.zeros_like(xpad_ref)
    xn_ref[...] = jnp.zeros_like(xn_ref)

    scale = scale_ref[...]           # (Cp, 1)      = 1/pixel_std, 0 for pad channels
    shiftm = shiftm_ref[...]         # (Cp, HpWp)   = (-mean/std) * valid_mask
    lmask = lmask_ref[...]           # (1, HpWp): 0 where col == 0
    rmask = rmask_ref[...]           # (1, HpWp): 0 where col == Wp-1

    for i in range(ipb):             # static unroll, imgs_per_step is small
        # 1) scatter raw pixel rows into the lane-dense x_norm slab (row stride Wp).
        for y in range(H):
            xn_ref[i, 0:C, y * Wp:y * Wp + W] = img_ref[i, :, y, :]
        # 2) one fused normalize pass over the whole padded slab; the masked
        #    shift keeps the zero padding (ImageList pads AFTER normalization).
        xn_slab = xn_ref[i] * scale + shiftm               # (Cp, HpWp) f32
        xn_ref[i] = xn_slab
        # 3) one contiguous store into the flat halo scratch.  Layout: flat
        #    index 1 + (r+1)*Wp + x holds padded row r, col x; halo rows r=-1,
        #    r=Hp and the +-1 guard slots are never written => stay zero.
        xpad_ref[:, base:base + HpWp] = xn_slab
        # 4) implicit im2col: 9 lane-shifted slices -> stacked operand block
        #    (all stores 8-sublane / 256-lane aligned).
        for dh in range(3):
            for dw in range(3):
                t = dh * 3 + dw
                s = dh * Wp + dw
                sh = xpad_ref[:, s:s + HpWp]               # (Cp, HpWp) f32
                if dw == 0:          # left tap: kill row-wrap at column 0
                    sh = sh * lmask
                elif dw == 2:        # right tap: kill row-wrap at column Wp-1
                    sh = sh * rmask
                stack_ref[t * Cp:(t + 1) * Cp, i * HpWp:(i + 1) * HpWp] = sh

    # 5) single K = 9*Cp bf16 matmul for the whole image block (one MXU push
    #    instead of 9 K=8 pushes; accumulation stays inside the MXU).
    stacked = stack_ref[...].astype(jnp.bfloat16)          # (9*Cp, ipb*HpWp)
    feat = jnp.dot(ws_ref[...], stacked,
                   preferred_element_type=jnp.float32)     # (F, ipb*HpWp) f32
    feat = jnp.maximum(feat + bs_ref[...], 0.0)

    # 6) 1x1 objectness head (RPN-style).
    obj = jnp.dot(wo_ref[...], feat.astype(jnp.bfloat16),
                  preferred_element_type=jnp.float32) + bo_ref[...]

    # 7) lane-aligned per-image splits -> bf16 output slabs (half the HBM writeback).
    for i in range(ipb):
        feat_ref[i] = feat[:, i * HpWp:(i + 1) * HpWp].astype(jnp.bfloat16)
        obj_ref[i] = obj[:, i * HpWp:(i + 1) * HpWp].astype(jnp.bfloat16)


# ---------------------------------------------------------------------------
# OFFLINE_AE.forward (inference-style path): preprocess -> backbone stem -> head
# ---------------------------------------------------------------------------
@jax.jit
def offline_ae_forward(images, pixel_mean, pixel_std, w_stem, b_stem, w_obj, b_obj):
    B, C, H, W = images.shape
    Hp = _round_up(H, SIZE_DIVISIBILITY)
    Wp = _round_up(W, SIZE_DIVISIBILITY)
    HpWp = Hp * Wp
    F = w_stem.shape[0]
    A = w_obj.shape[0]
    Cp = CP
    assert C <= Cp
    pad_len = (Hp + 2) * Wp + 2      # flat halo buffer length
    ipb = _pick_images_per_step(B)   # images per grid step (>=2 steps kept)

    # Hoisted normalization constants (reciprocal computed once) + pad masks.
    col = jnp.arange(HpWp, dtype=jnp.int32) % Wp
    row = jnp.arange(HpWp, dtype=jnp.int32) // Wp
    valid = ((row < H) & (col < W)).astype(jnp.float32).reshape(1, HpWp)
    scale = jnp.zeros((Cp, 1), jnp.float32).at[:C, 0].set(
        (1.0 / pixel_std).astype(jnp.float32))
    shift_m = jnp.zeros((Cp, 1), jnp.float32).at[:C, 0].set(
        (-pixel_mean / pixel_std).astype(jnp.float32)) * valid      # (Cp, HpWp)
    lmask = (col > 0).astype(jnp.float32).reshape(1, HpWp)
    rmask = (col < Wp - 1).astype(jnp.float32).reshape(1, HpWp)

    # Flatten OIHW 3x3 stem weights to tap-major (F, 9*Cp) bf16:
    #   ws_flat[f, (dh*3+dw)*Cp + c] = w_stem[f, c, dh, dw]  (c >= C columns are 0).
    w_bf = w_stem.astype(jnp.bfloat16)
    w_t = jnp.transpose(w_bf, (0, 2, 3, 1))                          # (F,3,3,C)
    w_t = jnp.pad(w_t, ((0, 0), (0, 0), (0, 0), (0, Cp - C)))
    ws_flat = w_t.reshape(F, 9 * Cp)

    bs = b_stem.reshape(F, 1).astype(jnp.float32)
    wo = w_obj.astype(jnp.bfloat16)
    bo = b_obj.reshape(A, 1).astype(jnp.float32)

    kernel = functools.partial(_offline_ae_fused_kernel, Hp=Hp, Wp=Wp)

    xn_flat, feat_flat, obj_flat = pl.pallas_call(
        kernel,
        out_shape=(
            jax.ShapeDtypeStruct((B, Cp, HpWp), jnp.float32),
            jax.ShapeDtypeStruct((B, F, HpWp), jnp.bfloat16),
            jax.ShapeDtypeStruct((B, A, HpWp), jnp.bfloat16),
        ),
        grid=(B // ipb,),
        in_specs=[
            pl.BlockSpec((Cp, 1), lambda g: (0, 0)),                  # scale
            pl.BlockSpec((Cp, HpWp), lambda g: (0, 0)),               # masked shift
            pl.BlockSpec((1, HpWp), lambda g: (0, 0)),                # lmask
            pl.BlockSpec((1, HpWp), lambda g: (0, 0)),                # rmask
            pl.BlockSpec((ipb, C, H, W), lambda g: (g, 0, 0, 0)),     # raw images
            pl.BlockSpec((F, 9 * Cp), lambda g: (0, 0)),              # stem weight
            pl.BlockSpec((F, 1), lambda g: (0, 0)),                   # stem bias
            pl.BlockSpec((A, F), lambda g: (0, 0)),                   # head weight
            pl.BlockSpec((A, 1), lambda g: (0, 0)),                   # head bias
        ],
        out_specs=(
            pl.BlockSpec((ipb, Cp, HpWp), lambda g: (g, 0, 0)),       # x_norm (padded C)
            pl.BlockSpec((ipb, F, HpWp), lambda g: (g, 0, 0)),        # features
            pl.BlockSpec((ipb, A, HpWp), lambda g: (g, 0, 0)),        # objectness
        ),
        scratch_shapes=[
            pltpu.VMEM((Cp, pad_len), jnp.float32),                   # flat halo
            pltpu.VMEM((9 * Cp, ipb * HpWp), jnp.float32),            # stacked im2col
        ],
        compiler_params=pltpu.CompilerParams(
            dimension_semantics=("parallel",)),
    )(scale, shift_m, lmask, rmask, images, ws_flat, bs, wo, bo)

    # Lane-dense slabs -> NCHW is a free contiguous reshape (no transpose).
    x_norm = xn_flat[:, :C, :].reshape(B, C, Hp, Wp)
    features = feat_flat.reshape(B, F, Hp, Wp)
    objectness = obj_flat.reshape(B, A, Hp, Wp)
    return x_norm, features, objectness


# ---------------------------------------------------------------------------
# Pure-JAX reference (test only) — same bf16 operand rounding as the kernel.
# ---------------------------------------------------------------------------
def _reference_forward(images, pixel_mean, pixel_std, w_stem, b_stem, w_obj, b_obj,
                       Hp, Wp):
    B, C, H, W = images.shape
    F = w_stem.shape[0]
    A = w_obj.shape[0]
    scale = (1.0 / pixel_std).reshape(1, C, 1, 1)
    shift = (-pixel_mean / pixel_std).reshape(1, C, 1, 1)
    xn = images * scale + shift
    xn = jnp.pad(xn, ((0, 0), (0, 0), (0, Hp - H), (0, Wp - W)))
    xhalo = jnp.pad(xn, ((0, 0), (0, 0), (1, 1), (1, 1)))
    w_bf = w_stem.astype(jnp.bfloat16).astype(jnp.float32)
    feat = jnp.zeros((B, F, Hp, Wp), jnp.float32)
    for dh in range(3):
        for dw in range(3):
            win = xhalo[:, :, dh:dh + Hp, dw:dw + Wp]
            win = win.astype(jnp.bfloat16).astype(jnp.float32)
            feat = feat + jnp.einsum("fc,bchw->bfhw", w_bf[:, :, dh, dw], win,
                                     precision=jax.lax.Precision.HIGHEST)
    feat = jnp.maximum(feat + b_stem.reshape(1, F, 1, 1), 0.0)
    obj = jnp.einsum("af,bfhw->bahw",
                     w_obj.astype(jnp.bfloat16).astype(jnp.float32),
                     feat.astype(jnp.bfloat16).astype(jnp.float32),
                     precision=jax.lax.Precision.HIGHEST)
    obj = obj + b_obj.reshape(1, A, 1, 1)
    return xn, feat, obj


if __name__ == "__main__":
    B, C, H, W = 4, 3, 14, 14          # pads to (16, 16) via size_divisibility
    F, A = 32, 8                       # stem channels, anchors-per-location

    key = jax.random.PRNGKey(0)
    k_img, k_stem, k_bs, k_obj, k_bo = jax.random.split(key, 5)

    images = jax.random.uniform(k_img, (B, C, H, W), jnp.float32) * 255.0
    pixel_mean = jnp.array([103.53, 116.28, 123.675], jnp.float32)
    pixel_std = jnp.array([57.375, 57.12, 58.395], jnp.float32)

    # Synthetic stem / head weights (PyTorch OIHW conv layout for the stem).
    w_stem = jax.random.normal(k_stem, (F, C, 3, 3), jnp.float32) * 0.05
    b_stem = jax.random.normal(k_bs, (F,), jnp.float32) * 0.01
    w_obj = jax.random.normal(k_obj, (A, F), jnp.float32) * 0.05
    b_obj = jax.random.normal(k_bo, (A,), jnp.float32) * 0.01

    x_norm, features, objectness = offline_ae_forward(
        images, pixel_mean, pixel_std, w_stem, b_stem, w_obj, b_obj)
    jax.block_until_ready((x_norm, features, objectness))

    Hp = _round_up(H, SIZE_DIVISIBILITY)
    Wp = _round_up(W, SIZE_DIVISIBILITY)
    assert x_norm.shape == (B, C, Hp, Wp)
    assert features.shape == (B, F, Hp, Wp)
    assert objectness.shape == (B, A, Hp, Wp)

    # Correctness check against a pure-JAX reference.
    xn_r, feat_r, obj_r = _reference_forward(
        images, pixel_mean, pixel_std, w_stem, b_stem, w_obj, b_obj, Hp, Wp)
    np.testing.assert_allclose(np.asarray(x_norm), np.asarray(xn_r),
                               rtol=1e-5, atol=1e-5)
    np.testing.assert_allclose(np.asarray(features.astype(jnp.float32)),
                               np.asarray(feat_r), rtol=2e-2, atol=2e-2)
    np.testing.assert_allclose(np.asarray(objectness.astype(jnp.float32)),
                               np.asarray(obj_r), rtol=2e-2, atol=2e-2)

    print("KERNEL_OK")
</pallas_src>

<mosaic_0001>
module attributes {stable_mosaic.version = 11 : i64} {
  func.func @_offline_ae_fused_kernel(%arg0: i32, %arg1: memref<8x1xf32, #tpu.memory_space<vmem>>, %arg2: memref<8x256xf32, #tpu.memory_space<vmem>>, %arg3: memref<1x256xf32, #tpu.memory_space<vmem>>, %arg4: memref<1x256xf32, #tpu.memory_space<vmem>>, %arg5: memref<2x3x14x14xf32, #tpu.memory_space<vmem>>, %arg6: memref<32x72xbf16, #tpu.memory_space<vmem>>, %arg7: memref<32x1xf32, #tpu.memory_space<vmem>>, %arg8: memref<8x32xbf16, #tpu.memory_space<vmem>>, %arg9: memref<8x1xf32, #tpu.memory_space<vmem>>, %arg10: memref<2x8x256xf32, #tpu.memory_space<vmem>>, %arg11: memref<2x32x256xbf16, #tpu.memory_space<vmem>>, %arg12: memref<2x8x256xbf16, #tpu.memory_space<vmem>>, %arg13: memref<8x290xf32, #tpu.memory_space<vmem>>, %arg14: memref<72x512xf32, #tpu.memory_space<vmem>>) attributes {dimension_semantics = [#tpu.dimension_semantics<parallel>], iteration_bounds = array<i64: 2>, scalar_prefetch = 0 : i64, scratch_operands = 2 : i64, tpu.core_type = #tpu.core_type<tc>, window_params = [{pipeline_mode = #tpu.pipeline_mode<synchronous>, transform_indices = @transform_0, window_bounds = array<i64: 8, 1>}, {pipeline_mode = #tpu.pipeline_mode<synchronous>, transform_indices = @transform_1, window_bounds = array<i64: 8, 256>}, {pipeline_mode = #tpu.pipeline_mode<synchronous>, transform_indices = @transform_2, window_bounds = array<i64: 1, 256>}, {pipeline_mode = #tpu.pipeline_mode<synchronous>, transform_indices = @transform_3, window_bounds = array<i64: 1, 256>}, {transform_indices = @transform_4, window_bounds = array<i64: 2, 3, 14, 14>}, {pipeline_mode = #tpu.pipeline_mode<synchronous>, transform_indices = @transform_5, window_bounds = array<i64: 32, 72>}, {pipeline_mode = #tpu.pipeline_mode<synchronous>, transform_indices = @transform_6, window_bounds = array<i64: 32, 1>}, {pipeline_mode = #tpu.pipeline_mode<synchronous>, transform_indices = @transform_7, window_bounds = array<i64: 8, 32>}, {pipeline_mode = #tpu.pipeline_mode<synchronous>, transform_indices = @transform_8, window_bounds = array<i64: 8, 1>}, {transform_indices = @transform_9, window_bounds = array<i64: 2, 8, 256>}, {transform_indices = @transform_10, window_bounds = array<i64: 2, 32, 256>}, {transform_indices = @transform_11, window_bounds = array<i64: 2, 8, 256>}]} {
    %cst = arith.constant 0.000000e+00 : f32
    %0 = vector.broadcast %cst : f32 to vector<8x290xf32>
    %c0 = arith.constant 0 : index
    %c0_0 = arith.constant 0 : index
    %1 = vector.load %arg13[%c0, %c0_0] : memref<8x290xf32, #tpu.memory_space<vmem>>, vector<8x290xf32>
    tpu.vector_store %arg13[%c0, %c0_0], %0 {strides = array<i32>} : memref<8x290xf32, #tpu.memory_space<vmem>>, vector<8x290xf32>,
    %cst_1 = arith.constant 0.000000e+00 : f32
    %2 = vector.broadcast %cst_1 : f32 to vector<2x8x256xf32>
    %c0_2 = arith.constant 0 : index
    %c0_3 = arith.constant 0 : index
    %c0_4 = arith.constant 0 : index
    %3 = vector.load %arg10[%c0_2, %c0_3, %c0_4] : memref<2x8x256xf32, #tpu.memory_space<vmem>>, vector<2x8x256xf32>
    tpu.vector_store %arg10[%c0_2, %c0_3, %c0_4], %2 {strides = array<i32>} : memref<2x8x256xf32, #tpu.memory_space<vmem>>, vector<2x8x256xf32>,
    %c0_5 = arith.constant 0 : index
    %c0_6 = arith.constant 0 : index
    %4 = vector.load %arg1[%c0_5, %c0_6] : memref<8x1xf32, #tpu.memory_space<vmem>>, vector<8x1xf32>
    %c0_7 = arith.constant 0 : index
    %c0_8 = arith.constant 0 : index
    %5 = vector.load %arg2[%c0_7, %c0_8] : memref<8x256xf32, #tpu.memory_space<vmem>>, vector<8x256xf32>
    %c0_9 = arith.constant 0 : index
    %c0_10 = arith.constant 0 : index
    %6 = vector.load %arg3[%c0_9, %c0_10] : memref<1x256xf32, #tpu.memory_space<vmem>>, vector<1x256xf32>
    %c0_11 = arith.constant 0 : index
    %c0_12 = arith.constant 0 : index
    %7 = vector.load %arg4[%c0_11, %c0_12] : memref<1x256xf32, #tpu.memory_space<vmem>>, vector<1x256xf32>
    %c0_13 = arith.constant 0 : index
    %c0_14 = arith.constant 0 : index
    %c0_15 = arith.constant 0 : index
    %c0_16 = arith.constant 0 : index
    %8 = vector.load %arg5[%c0_13, %c0_14, %c0_15, %c0_16] : memref<2x3x14x14xf32, #tpu.memory_space<vmem>>, vector<1x3x1x14xf32>
    %9 = vector.shape_cast %8 : vector<1x3x1x14xf32> to vector<3x14xf32>
    %c0_17 = arith.constant 0 : index
    %c0_18 = arith.constant 0 : index
    %c0_19 = arith.constant 0 : index
    %10 = vector.load %arg10[%c0_17, %c0_18, %c0_19] : memref<2x8x256xf32, #tpu.memory_space<vmem>>, vector<1x3x14xf32>
    %11 = vector.shape_cast %10 : vector<1x3x14xf32> to vector<3x14xf32>
    %12 = vector.shape_cast %9 : vector<3x14xf32> to vector<1x3x14xf32>
    tpu.vector_store %arg10[%c0_17, %c0_18, %c0_19], %12 {strides = array<i32>} : memref<2x8x256xf32, #tpu.memory_space<vmem>>, vector<1x3x14xf32>,
    %c0_20 = arith.constant 0 : index
    %c0_21 = arith.constant 0 : index
    %c1 = arith.constant 1 : index
    %c0_22 = arith.constant 0 : index
    %13 = vector.load %arg5[%c0_20, %c0_21, %c1, %c0_22] : memref<2x3x14x14xf32, #tpu.memory_space<vmem>>, vector<1x3x1x14xf32>
    %14 = vector.shape_cast %13 : vector<1x3x1x14xf32> to vector<3x14xf32>
    %c0_23 = arith.constant 0 : index
    %c0_24 = arith.constant 0 : index
    %c16 = arith.constant 16 : index
    %15 = vector.load %arg10[%c0_23, %c0_24, %c16] : memref<2x8x256xf32, #tpu.memory_space<vmem>>, vector<1x3x14xf32>
    %16 = vector.shape_cast %15 : vector<1x3x14xf32> to vector<3x14xf32>
    %17 = vector.shape_cast %14 : vector<3x14xf32> to vector<1x3x14xf32>
    tpu.vector_store %arg10[%c0_23, %c0_24, %c16], %17 {strides = array<i32>} : memref<2x8x256xf32, #tpu.memory_space<vmem>>, vector<1x3x14xf32>,
    %c0_25 = arith.constant 0 : index
    %c0_26 = arith.constant 0 : index
    %c2 = arith.constant 2 : index
    %c0_27 = arith.constant 0 : index
    %18 = vector.load %arg5[%c0_25, %c0_26, %c2, %c0_27] : memref<2x3x14x14xf32, #tpu.memory_space<vmem>>, vector<1x3x1x14xf32>
    %19 = vector.shape_cast %18 : vector<1x3x1x14xf32> to vector<3x14xf32>
    %c0_28 = arith.constant 0 : index
    %c0_29 = arith.constant 0 : index
    %c32 = arith.constant 32 : index
    %20 = vector.load %arg10[%c0_28, %c0_29, %c32] : memref<2x8x256xf32, #tpu.memory_space<vmem>>, vector<1x3x14xf32>
    %21 = vector.shape_cast %20 : vector<1x3x14xf32> to vector<3x14xf32>
    %22 = vector.shape_cast %19 : vector<3x14xf32> to vector<1x3x14xf32>
    tpu.vector_store %arg10[%c0_28, %c0_29, %c32], %22 {strides = array<i32>} : memref<2x8x256xf32, #tpu.memory_space<vmem>>, vector<1x3x14xf32>,
    %c0_30 = arith.constant 0 : index
    %c0_31 = arith.constant 0 : index
    %c3 = arith.constant 3 : index
    %c0_32 = arith.constant 0 : index
    %23 = vector.load %arg5[%c0_30, %c0_31, %c3, %c0_32] : memref<2x3x14x14xf32, #tpu.memory_space<vmem>>, vector<1x3x1x14xf32>
    %24 = vector.shape_cast %23 : vector<1x3x1x14xf32> to vector<3x14xf32>
    %c0_33 = arith.constant 0 : index
    %c0_34 = arith.constant 0 : index
    %c48 = arith.constant 48 : index
    %25 = vector.load %arg10[%c0_33, %c0_34, %c48] : memref<2x8x256xf32, #tpu.memory_space<vmem>>, vector<1x3x14xf32>
    %26 = vector.shape_cast %25 : vector<1x3x14xf32> to vector<3x14xf32>
    %27 = vector.shape_cast %24 : vector<3x14xf32> to vector<1x3x14xf32>
    tpu.vector_store %arg10[%c0_33, %c0_34, %c48], %27 {strides = array<i32>} : memref<2x8x256xf32, #tpu.memory_space<vmem>>, vector<1x3x14xf32>,
    %c0_35 = arith.constant 0 : index
    %c0_36 = arith.constant 0 : index
    %c4 = arith.constant 4 : index
    %c0_37 = arith.constant 0 : index
    %28 = vector.load %arg5[%c0_35, %c0_36, %c4, %c0_37] : memref<2x3x14x14xf32, #tpu.memory_space<vmem>>, vector<1x3x1x14xf32>
    %29 = vector.shape_cast %28 : vector<1x3x1x14xf32> to vector<3x14xf32>
    %c0_38 = arith.constant 0 : index
    %c0_39 = arith.constant 0 : index
    %c64 = arith.constant 64 : index
    %30 = vector.load %arg10[%c0_38, %c0_39, %c64] : memref<2x8x256xf32, #tpu.memory_space<vmem>>, vector<1x3x14xf32>
    %31 = vector.shape_cast %30 : vector<1x3x14xf32> to vector<3x14xf32>
    %32 = vector.shape_cast %29 : vector<3x14xf32> to vector<1x3x14xf32>
    tpu.vector_store %arg10[%c0_38, %c0_39, %c64], %32 {strides = array<i32>} : memref<2x8x256xf32, #tpu.memory_space<vmem>>, vector<1x3x14xf32>,
    %c0_40 = arith.constant 0 : index
    %c0_41 = arith.constant 0 : index
    %c5 = arith.constant 5 : index
    %c0_42 = arith.constant 0 : index
    %33 = vector.load %arg5[%c0_40, %c0_41, %c5, %c0_42] : memref<2x3x14x14xf32, #tpu.memory_space<vmem>>, vector<1x3x1x14xf32>
    %34 = vector.shape_cast %33 : vector<1x3x1x14xf32> to vector<3x14xf32>
    %c0_43 = arith.constant 0 : index
    %c0_44 = arith.constant 0 : index
    %c80 = arith.constant 80 : index
    %35 = vector.load %arg10[%c0_43, %c0_44, %c80] : memref<2x8x256xf32, #tpu.memory_space<vmem>>, vector<1x3x14xf32>
    %36 = vector.shape_cast %35 : vector<1x3x14xf32> to vector<3x14xf32>
    %37 = vector.shape_cast %34 : vector<3x14xf32> to vector<1x3x14xf32>
    tpu.vector_store %arg10[%c0_43, %c0_44, %c80], %37 {strides = array<i32>} : memref<2x8x256xf32, #tpu.memory_space<vmem>>, vector<1x3x14xf32>,
    %c0_45 = arith.constant 0 : index
    %c0_46 = arith.constant 0 : index
    %c6 = arith.constant 6 : index
    %c0_47 = arith.constant 0 : index
    %38 = vector.load %arg5[%c0_45, %c0_46, %c6, %c0_47] : memref<2x3x14x14xf32, #tpu.memory_space<vmem>>, vector<1x3x1x14xf32>
    %39 = vector.shape_cast %38 : vector<1x3x1x14xf32> to vector<3x14xf32>
    %c0_48 = arith.constant 0 : index
    %c0_49 = arith.constant 0 : index
    %c96 = arith.constant 96 : index
    %40 = vector.load %arg10[%c0_48, %c0_49, %c96] : memref<2x8x256xf32, #tpu.memory_space<vmem>>, vector<1x3x14xf32>
    %41 = vector.shape_cast %40 : vector<1x3x14xf32> to vector<3x14xf32>
    %42 = vector.shape_cast %39 : vector<3x14xf32> to vector<1x3x14xf32>
    tpu.vector_store %arg10[%c0_48, %c0_49, %c96], %42 {strides = array<i32>} : memref<2x8x256xf32, #tpu.memory_space<vmem>>, vector<1x3x14xf32>,
    %c0_50 = arith.constant 0 : index
    %c0_51 = arith.constant 0 : index
    %c7 = arith.constant 7 : index
    %c0_52 = arith.constant 0 : index
    %43 = vector.load %arg5[%c0_50, %c0_51, %c7, %c0_52] : memref<2x3x14x14xf32, #tpu.memory_space<vmem>>, vector<1x3x1x14xf32>
    %44 = vector.shape_cast %43 : vector<1x3x1x14xf32> to vector<3x14xf32>
    %c0_53 = arith.constant 0 : index
    %c0_54 = arith.constant 0 : index
    %c112 = arith.constant 112 : index
    %45 = vector.load %arg10[%c0_53, %c0_54, %c112] : memref<2x8x256xf32, #tpu.memory_space<vmem>>, vector<1x3x14xf32>
    %46 = vector.shape_cast %45 : vector<1x3x14xf32> to vector<3x14xf32>
    %47 = vector.shape_cast %44 : vector<3x14xf32> to vector<1x3x14xf32>
    tpu.vector_store %arg10[%c0_53, %c0_54, %c112], %47 {strides = array<i32>} : memref<2x8x256xf32, #tpu.memory_space<vmem>>, vector<1x3x14xf32>,
    %c0_55 = arith.constant 0 : index
    %c0_56 = arith.constant 0 : index
    %c8 = arith.constant 8 : index
    %c0_57 = arith.constant 0 : index
    %48 = vector.load %arg5[%c0_55, %c0_56, %c8, %c0_57] : memref<2x3x14x14xf32, #tpu.memory_space<vmem>>, vector<1x3x1x14xf32>
    %49 = vector.shape_cast %48 : vector<1x3x1x14xf32> to vector<3x14xf32>
    %c0_58 = arith.constant 0 : index
    %c0_59 = arith.constant 0 : index
    %c128 = arith.constant 128 : index
    %50 = vector.load %arg10[%c0_58, %c0_59, %c128] : memref<2x8x256xf32, #tpu.memory_space<vmem>>, vector<1x3x14xf32>
    %51 = vector.shape_cast %50 : vector<1x3x14xf32> to vector<3x14xf32>
    %52 = vector.shape_cast %49 : vector<3x14xf32> to vector<1x3x14xf32>
    tpu.vector_store %arg10[%c0_58, %c0_59, %c128], %52 {strides = array<i32>} : memref<2x8x256xf32, #tpu.memory_space<vmem>>, vector<1x3x14xf32>,
    %c0_60 = arith.constant 0 : index
    %c0_61 = arith.constant 0 : index
    %c9 = arith.constant 9 : index
    %c0_62 = arith.constant 0 : index
    %53 = vector.load %arg5[%c0_60, %c0_61, %c9, %c0_62] : memref<2x3x14x14xf32, #tpu.memory_space<vmem>>, vector<1x3x1x14xf32>
    %54 = vector.shape_cast %53 : vector<1x3x1x14xf32> to vector<3x14xf32>
    %c0_63 = arith.constant 0 : index
    %c0_64 = arith.constant 0 : index
    %c144 = arith.constant 144 : index
    %55 = vector.load %arg10[%c0_63, %c0_64, %c144] : memref<2x8x256xf32, #tpu.memory_space<vmem>>, vector<1x3x14xf32>
    %56 = vector.shape_cast %55 : vector<1x3x14xf32> to vector<3x14xf32>
    %57 = vector.shape_cast %54 : vector<3x14xf32> to vector<1x3x14xf32>
    tpu.vector_store %arg10[%c0_63, %c0_64, %c144], %57 {strides = array<i32>} : memref<2x8x256xf32, #tpu.memory_space<vmem>>, vector<1x3x14xf32>,
    %c0_65 = arith.constant 0 : index
    %c0_66 = arith.constant 0 : index
    %c10 = arith.constant 10 : index
    %c0_67 = arith.constant 0 : index
    %58 = vector.load %arg5[%c0_65, %c0_66, %c10, %c0_67] : memref<2x3x14x14xf32, #tpu.memory_space<vmem>>, vector<1x3x1x14xf32>
    %59 = vector.shape_cast %58 : vector<1x3x1x14xf32> to vector<3x14xf32>
    %c0_68 = arith.constant 0 : index
    %c0_69 = arith.constant 0 : index
    %c160 = arith.constant 160 : index
    %60 = vector.load %arg10[%c0_68, %c0_69, %c160] : memref<2x8x256xf32, #tpu.memory_space<vmem>>, vector<1x3x14xf32>
    %61 = vector.shape_cast %60 : vector<1x3x14xf32> to vector<3x14xf32>
    %62 = vector.shape_cast %59 : vector<3x14xf32> to vector<1x3x14xf32>
    tpu.vector_store %arg10[%c0_68, %c0_69, %c160], %62 {strides = array<i32>} : memref<2x8x256xf32, #tpu.memory_space<vmem>>, vector<1x3x14xf32>,
    %c0_70 = arith.constant 0 : index
    %c0_71 = arith.constant 0 : index
    %c11 = arith.constant 11 : index
    %c0_72 = arith.constant 0 : index
    %63 = vector.load %arg5[%c0_70, %c0_71, %c11, %c0_72] : memref<2x3x14x14xf32, #tpu.memory_space<vmem>>, vector<1x3x1x14xf32>
    %64 = vector.shape_cast %63 : vector<1x3x1x14xf32> to vector<3x14xf32>
    %c0_73 = arith.constant 0 : index
    %c0_74 = arith.constant 0 : index
    %c176 = arith.constant 176 : index
    %65 = vector.load %arg10[%c0_73, %c0_74, %c176] : memref<2x8x256xf32, #tpu.memory_space<vmem>>, vector<1x3x14xf32>
    %66 = vector.shape_cast %65 : vector<1x3x14xf32> to vector<3x14xf32>
    %67 = vector.shape_cast %64 : vector<3x14xf32> to vector<1x3x14xf32>
    tpu.vector_store %arg10[%c0_73, %c0_74, %c176], %67 {strides = array<i32>} : memref<2x8x256xf32, #tpu.memory_space<vmem>>, vector<1x3x14xf32>,
    %c0_75 = arith.constant 0 : index
    %c0_76 = arith.constant 0 : index
    %c12 = arith.constant 12 : index
    %c0_77 = arith.constant 0 : index
    %68 = vector.load %arg5[%c0_75, %c0_76, %c12, %c0_77] : memref<2x3x14x14xf32, #tpu.memory_space<vmem>>, vector<1x3x1x14xf32>
    %69 = vector.shape_cast %68 : vector<1x3x1x14xf32> to vector<3x14xf32>
    %c0_78 = arith.constant 0 : index
    %c0_79 = arith.constant 0 : index
    %c192 = arith.constant 192 : index
    %70 = vector.load %arg10[%c0_78, %c0_79, %c192] : memref<2x8x256xf32, #tpu.memory_space<vmem>>, vector<1x3x14xf32>
    %71 = vector.shape_cast %70 : vector<1x3x14xf32> to vector<3x14xf32>
    %72 = vector.shape_cast %69 : vector<3x14xf32> to vector<1x3x14xf32>
    tpu.vector_store %arg10[%c0_78, %c0_79, %c192], %72 {strides = array<i32>} : memref<2x8x256xf32, #tpu.memory_space<vmem>>, vector<1x3x14xf32>,
    %c0_80 = arith.constant 0 : index
    %c0_81 = arith.constant 0 : index
    %c13 = arith.constant 13 : index
    %c0_82 = arith.constant 0 : index
    %73 = vector.load %arg5[%c0_80, %c0_81, %c13, %c0_82] : memref<2x3x14x14xf32, #tpu.memory_space<vmem>>, vector<1x3x1x14xf32>
    %74 = vector.shape_cast %73 : vector<1x3x1x14xf32> to vector<3x14xf32>
    %c0_83 = arith.constant 0 : index
    %c0_84 = arith.constant 0 : index
    %c208 = arith.constant 208 : index
    %75 = vector.load %arg10[%c0_83, %c0_84, %c208] : memref<2x8x256xf32, #tpu.memory_space<vmem>>, vector<1x3x14xf32>
    %76 = vector.shape_cast %75 : vector<1x3x14xf32> to vector<3x14xf32>
    %77 = vector.shape_cast %74 : vector<3x14xf32> to vector<1x3x14xf32>
    tpu.vector_store %arg10[%c0_83, %c0_84, %c208], %77 {strides = array<i32>} : memref<2x8x256xf32, #tpu.memory_space<vmem>>, vector<1x3x14xf32>,
    %c0_85 = arith.constant 0 : index
    %c0_86 = arith.constant 0 : index
    %c0_87 = arith.constant 0 : index
    %78 = vector.load %arg10[%c0_85, %c0_86, %c0_87] : memref<2x8x256xf32, #tpu.memory_space<vmem>>, vector<1x8x256xf32>
    %79 = vector.shape_cast %78 : vector<1x8x256xf32> to vector<8x256xf32>
    %80 = vector.broadcast %4 : vector<8x1xf32> to vector<8x256xf32>
    %81 = arith.mulf %79, %80 : vector<8x256xf32>
    %82 = arith.addf %81, %5 : vector<8x256xf32>
    %c0_88 = arith.constant 0 : index
    %c0_89 = arith.constant 0 : index
    %c0_90 = arith.constant 0 : index
    %83 = vector.load %arg10[%c0_88, %c0_89, %c0_90] : memref<2x8x256xf32, #tpu.memory_space<vmem>>, vector<1x8x256xf32>
    %84 = vector.shape_cast %83 : vector<1x8x256xf32> to vector<8x256xf32>
    %85 = vector.shape_cast %82 : vector<8x256xf32> to vector<1x8x256xf32>
    tpu.vector_store %arg10[%c0_88, %c0_89, %c0_90], %85 {strides = array<i32>} : memref<2x8x256xf32, #tpu.memory_space<vmem>>, vector<1x8x256xf32>,
    %c0_91 = arith.constant 0 : index
    %c17 = arith.constant 17 : index
    %86 = vector.load %arg13[%c0_91, %c17] : memref<8x290xf32, #tpu.memory_space<vmem>>, vector<8x256xf32>
    tpu.vector_store %arg13[%c0_91, %c17], %82 {strides = array<i32>} : memref<8x290xf32, #tpu.memory_space<vmem>>, vector<8x256xf32>,
    %c0_92 = arith.constant 0 : index
    %c0_93 = arith.constant 0 : index
    %87 = vector.load %arg13[%c0_92, %c0_93] : memref<8x290xf32, #tpu.memory_space<vmem>>, vector<8x256xf32>
    %88 = vector.broadcast %6 : vector<1x256xf32> to vector<8x256xf32>
    %89 = arith.mulf %87, %88 : vector<8x256xf32>
    %c0_94 = arith.constant 0 : index
    %c0_95 = arith.constant 0 : index
    %90 = vector.load %arg14[%c0_94, %c0_95] : memref<72x512xf32, #tpu.memory_space<vmem>>, vector<8x256xf32>
    tpu.vector_store %arg14[%c0_94, %c0_95], %89 {strides = array<i32>} : memref<72x512xf32, #tpu.memory_space<vmem>>, vector<8x256xf32>,
    %c0_96 = arith.constant 0 : index
    %c1_97 = arith.constant 1 : index
    %91 = vector.load %arg13[%c0_96, %c1_97] : memref<8x290xf32, #tpu.memory_space<vmem>>, vector<8x256xf32>
    %c8_98 = arith.constant 8 : index
    %c0_99 = arith.constant 0 : index
    %92 = vector.load %arg14[%c8_98, %c0_99] : memref<72x512xf32, #tpu.memory_space<vmem>>, vector<8x256xf32>
    tpu.vector_store %arg14[%c8_98, %c0_99], %91 {strides = array<i32>} : memref<72x512xf32, #tpu.memory_space<vmem>>, vector<8x256xf32>,
    %c0_100 = arith.constant 0 : index
    %c2_101 = arith.constant 2 : index
    %93 = vector.load %arg13[%c0_100, %c2_101] : memref<8x290xf32, #tpu.memory_space<vmem>>, vector<8x256xf32>
    %94 = vector.broadcast %7 : vector<1x256xf32> to vector<8x256xf32>
    %95 = arith.mulf %93, %94 : vector<8x256xf32>
    %c16_102 = arith.constant 16 : index
    %c0_103 = arith.constant 0 : index
    %96 = vector.load %arg14[%c16_102, %c0_103] : memref<72x512xf32, #tpu.memory_space<vmem>>, vector<8x256xf32>
    tpu.vector_store %arg14[%c16_102, %c0_103], %95 {strides = array<i32>} : memref<72x512xf32, #tpu.memory_space<vmem>>, vector<8x256xf32>,
    %c0_104 = arith.constant 0 : index
    %c16_105 = arith.constant 16 : index
    %97 = vector.load %arg13[%c0_104, %c16_105] : memref<8x290xf32, #tpu.memory_space<vmem>>, vector<8x256xf32>
    %98 = vector.broadcast %6 : vector<1x256xf32> to vector<8x256xf32>
    %99 = arith.mulf %97, %98 : vector<8x256xf32>
    %c24 = arith.constant 24 : index
    %c0_106 = arith.constant 0 : index
    %100 = vector.load %arg14[%c24, %c0_106] : memref<72x512xf32, #tpu.memory_space<vmem>>, vector<8x256xf32>
    tpu.vector_store %arg14[%c24, %c0_106], %99 {strides = array<i32>} : memref<72x512xf32, #tpu.memory_space<vmem>>, vector<8x256xf32>,
    %c0_107 = arith.constant 0 : index
    %c17_108 = arith.constant 17 : index
    %101 = vector.load %arg13[%c0_107, %c17_108] : memref<8x290xf32, #tpu.memory_space<vmem>>, vector<8x256xf32>
    %c32_109 = arith.constant 32 : index
    %c0_110 = arith.constant 0 : index
    %102 = vector.load %arg14[%c32_109, %c0_110] : memref<72x512xf32, #tpu.memory_space<vmem>>, vector<8x256xf32>
    tpu.vector_store %arg14[%c32_109, %c0_110], %101 {strides = array<i32>} : memref<72x512xf32, #tpu.memory_space<vmem>>, vector<8x256xf32>,
    %c0_111 = arith.constant 0 : index
    %c18 = arith.constant 18 : index
    %103 = vector.load %arg13[%c0_111, %c18] : memref<8x290xf32, #tpu.memory_space<vmem>>, vector<8x256xf32>
    %104 = vector.broadcast %7 : vector<1x256xf32> to vector<8x256xf32>
    %105 = arith.mulf %103, %104 : vector<8x256xf32>
    %c40 = arith.constant 40 : index
    %c0_112 = arith.constant 0 : index
    %106 = vector.load %arg14[%c40, %c0_112] : memref<72x512xf32, #tpu.memory_space<vmem>>, vector<8x256xf32>
    tpu.vector_store %arg14[%c40, %c0_112], %105 {strides = array<i32>} : memref<72x512xf32, #tpu.memory_space<vmem>>, vector<8x256xf32>,
    %c0_113 = arith.constant 0 : index
    %c32_114 = arith.constant 32 : index
    %107 = vector.load %arg13[%c0_113, %c32_114] : memref<8x290xf32, #tpu.memory_space<vmem>>, vector<8x256xf32>
    %108 = vector.broadcast %6 : vector<1x256xf32> to vector<8x256xf32>
    %109 = arith.mulf %107, %108 : vector<8x256xf32>
    %c48_115 = arith.constant 48 : index
    %c0_116 = arith.constant 0 : index
    %110 = vector.load %arg14[%c48_115, %c0_116] : memref<72x512xf32, #tpu.memory_space<vmem>>, vector<8x256xf32>
    tpu.vector_store %arg14[%c48_115, %c0_116], %109 {strides = array<i32>} : memref<72x512xf32, #tpu.memory_space<vmem>>, vector<8x256xf32>,
    %c0_117 = arith.constant 0 : index
    %c33 = arith.constant 33 : index
    %111 = vector.load %arg13[%c0_117, %c33] : memref<8x290xf32, #tpu.memory_space<vmem>>, vector<8x256xf32>
    %c56 = arith.constant 56 : index
    %c0_118 = arith.constant 0 : index
    %112 = vector.load %arg14[%c56, %c0_118] : memref<72x512xf32, #tpu.memory_space<vmem>>, vector<8x256xf32>
    tpu.vector_store %arg14[%c56, %c0_118], %111 {strides = array<i32>} : memref<72x512xf32, #tpu.memory_space<vmem>>, vector<8x256xf32>,
    %c0_119 = arith.constant 0 : index
    %c34 = arith.constant 34 : index
    %113 = vector.load %arg13[%c0_119, %c34] : memref<8x290xf32, #tpu.memory_space<vmem>>, vector<8x256xf32>
    %114 = vector.broadcast %7 : vector<1x256xf32> to vector<8x256xf32>
    %115 = arith.mulf %113, %114 : vector<8x256xf32>
    %c64_120 = arith.constant 64 : index
    %c0_121 = arith.constant 0 : index
    %116 = vector.load %arg14[%c64_120, %c0_121] : memref<72x512xf32, #tpu.memory_space<vmem>>, vector<8x256xf32>
    tpu.vector_store %arg14[%c64_120, %c0_121], %115 {strides = array<i32>} : memref<72x512xf32, #tpu.memory_space<vmem>>, vector<8x256xf32>,
    %c1_122 = arith.constant 1 : index
    %c0_123 = arith.constant 0 : index
    %c0_124 = arith.constant 0 : index
    %c0_125 = arith.constant 0 : index
    %117 = vector.load %arg5[%c1_122, %c0_123, %c0_124, %c0_125] : memref<2x3x14x14xf32, #tpu.memory_space<vmem>>, vector<1x3x1x14xf32>
    %118 = vector.shape_cast %117 : vector<1x3x1x14xf32> to vector<3x14xf32>
    %c1_126 = arith.constant 1 : index
    %c0_127 = arith.constant 0 : index
    %c0_128 = arith.constant 0 : index
    %119 = vector.load %arg10[%c1_126, %c0_127, %c0_128] : memref<2x8x256xf32, #tpu.memory_space<vmem>>, vector<1x3x14xf32>
    %120 = vector.shape_cast %119 : vector<1x3x14xf32> to vector<3x14xf32>
    %121 = vector.shape_cast %118 : vector<3x14xf32> to vector<1x3x14xf32>
    tpu.vector_store %arg10[%c1_126, %c0_127, %c0_128], %121 {strides = array<i32>} : memref<2x8x256xf32, #tpu.memory_space<vmem>>, vector<1x3x14xf32>,
    %c1_129 = arith.constant 1 : index
    %c0_130 = arith.constant 0 : index
    %c1_131 = arith.constant 1 : index
    %c0_132 = arith.constant 0 : index
    %122 = vector.load %arg5[%c1_129, %c0_130, %c1_131, %c0_132] : memref<2x3x14x14xf32, #tpu.memory_space<vmem>>, vector<1x3x1x14xf32>
    %123 = vector.shape_cast %122 : vector<1x3x1x14xf32> to vector<3x14xf32>
    %c1_133 = arith.constant 1 : index
    %c0_134 = arith.constant 0 : index
    %c16_135 = arith.constant 16 : index
    %124 = vector.load %arg10[%c1_133, %c0_134, %c16_135] : memref<2x8x256xf32, #tpu.memory_space<vmem>>, vector<1x3x14xf32>
    %125 = vector.shape_cast %124 : vector<1x3x14xf32> to vector<3x14xf32>
    %126 = vector.shape_cast %123 : vector<3x14xf32> to vector<1x3x14xf32>
    tpu.vector_store %arg10[%c1_133, %c0_134, %c16_135], %126 {strides = array<i32>} : memref<2x8x256xf32, #tpu.memory_space<vmem>>, vector<1x3x14xf32>,
    %c1_136 = arith.constant 1 : index
    %c0_137 = arith.constant 0 : index
    %c2_138 = arith.constant 2 : index
    %c0_139 = arith.constant 0 : index
    %127 = vector.load %arg5[%c1_136, %c0_137, %c2_138, %c0_139] : memref<2x3x14x14xf32, #tpu.memory_space<vmem>>, vector<1x3x1x14xf32>
    %128 = vector.shape_cast %127 : vector<1x3x1x14xf32> to vector<3x14xf32>
    %c1_140 = arith.constant 1 : index
    %c0_141 = arith.constant 0 : index
    %c32_142 = arith.constant 32 : index
    %129 = vector.load %arg10[%c1_140, %c0_141, %c32_142] : memref<2x8x256xf32, #tpu.memory_space<vmem>>, vector<1x3x14xf32>
    %130 = vector.shape_cast %129 : vector<1x3x14xf32> to vector<3x14xf32>
    %131 = vector.shape_cast %128 : vector<3x14xf32> to vector<1x3x14xf32>
    tpu.vector_store %arg10[%c1_140, %c0_141, %c32_142], %131 {strides = array<i32>} : memref<2x8x256xf32, #tpu.memory_space<vmem>>, vector<1x3x14xf32>,
    %c1_143 = arith.constant 1 : index
    %c0_144 = arith.constant 0 : index
    %c3_145 = arith.constant 3 : index
    %c0_146 = arith.constant 0 : index
    %132 = vector.load %arg5[%c1_143, %c0_144, %c3_145, %c0_146] : memref<2x3x14x14xf32, #tpu.memory_space<vmem>>, vector<1x3x1x14xf32>
    %133 = vector.shape_cast %132 : vector<1x3x1x14xf32> to vector<3x14xf32>
    %c1_147 = arith.constant 1 : index
    %c0_148 = arith.constant 0 : index
    %c48_149 = arith.constant 48 : index
    %134 = vector.load %arg10[%c1_147, %c0_148, %c48_149] : memref<2x8x256xf32, #tpu.memory_space<vmem>>, vector<1x3x14xf32>
    %135 = vector.shape_cast %134 : vector<1x3x14xf32> to vector<3x14xf32>
    %136 = vector.shape_cast %133 : vector<3x14xf32> to vector<1x3x14xf32>
    tpu.vector_store %arg10[%c1_147, %c0_148, %c48_149], %136 {strides = array<i32>} : memref<2x8x256xf32, #tpu.memory_space<vmem>>, vector<1x3x14xf32>,
    %c1_150 = arith.constant 1 : index
    %c0_151 = arith.constant 0 : index
    %c4_152 = arith.constant 4 : index
    %c0_153 = arith.constant 0 : index
    %137 = vector.load %arg5[%c1_150, %c0_151, %c4_152, %c0_153] : memref<2x3x14x14xf32, #tpu.memory_space<vmem>>, vector<1x3x1x14xf32>
    %138 = vector.shape_cast %137 : vector<1x3x1x14xf32> to vector<3x14xf32>
    %c1_154 = arith.constant 1 : index
    %c0_155 = arith.constant 0 : index
    %c64_156 = arith.constant 64 : index
    %139 = vector.load %arg10[%c1_154, %c0_155, %c64_156] : memref<2x8x256xf32, #tpu.memory_space<vmem>>, vector<1x3x14xf32>
    %140 = vector.shape_cast %139 : vector<1x3x14xf32> to vector<3x14xf32>
    %141 = vector.shape_cast %138 : vector<3x14xf32> to vector<1x3x14xf32>
    tpu.vector_store %arg10[%c1_154, %c0_155, %c64_156], %141 {strides = array<i32>} : memref<2x8x256xf32, #tpu.memory_space<vmem>>, vector<1x3x14xf32>,
    %c1_157 = arith.constant 1 : index
    %c0_158 = arith.constant 0 : index
    %c5_159 = arith.constant 5 : index
    %c0_160 = arith.constant 0 : index
    %142 = vector.load %arg5[%c1_157, %c0_158, %c5_159, %c0_160] : memref<2x3x14x14xf32, #tpu.memory_space<vmem>>, vector<1x3x1x14xf32>
    %143 = vector.shape_cast %142 : vector<1x3x1x14xf32> to vector<3x14xf32>
    %c1_161 = arith.constant 1 : index
    %c0_162 = arith.constant 0 : index
    %c80_163 = arith.constant 80 : index
    %144 = vector.load %arg10[%c1_161, %c0_162, %c80_163] : memref<2x8x256xf32, #tpu.memory_space<vmem>>, vector<1x3x14xf32>
    %145 = vector.shape_cast %144 : vector<1x3x14xf32> to vector<3x14xf32>
    %146 = vector.shape_cast %143 : vector<3x14xf32> to vector<1x3x14xf32>
    tpu.vector_store %arg10[%c1_161, %c0_162, %c80_163], %146 {strides = array<i32>} : memref<2x8x256xf32, #tpu.memory_space<vmem>>, vector<1x3x14xf32>,
    %c1_164 = arith.constant 1 : index
    %c0_165 = arith.constant 0 : index
    %c6_166 = arith.constant 6 : index
    %c0_167 = arith.constant 0 : index
    %147 = vector.load %arg5[%c1_164, %c0_165, %c6_166, %c0_167] : memref<2x3x14x14xf32, #tpu.memory_space<vmem>>, vector<1x3x1x14xf32>
    %148 = vector.shape_cast %147 : vector<1x3x1x14xf32> to vector<3x14xf32>
    %c1_168 = arith.constant 1 : index
    %c0_169 = arith.constant 0 : index
    %c96_170 = arith.constant 96 : index
    %149 = vector.load %arg10[%c1_168, %c0_169, %c96_170] : memref<2x8x256xf32, #tpu.memory_space<vmem>>, vector<1x3x14xf32>
    %150 = vector.shape_cast %149 : vector<1x3x14xf32> to vector<3x14xf32>
    %151 = vector.shape_cast %148 : vector<3x14xf32> to vector<1x3x14xf32>
    tpu.vector_store %arg10[%c1_168, %c0_169, %c96_170], %151 {strides = array<i32>} : memref<2x8x256xf32, #tpu.memory_space<vmem>>, vector<1x3x14xf32>,
    %c1_171 = arith.constant 1 : index
    %c0_172 = arith.constant 0 : index
    %c7_173 = arith.constant 7 : index
    %c0_174 = arith.constant 0 : index
    %152 = vector.load %arg5[%c1_171, %c0_172, %c7_173, %c0_174] : memref<2x3x14x14xf32, #tpu.memory_space<vmem>>, vector<1x3x1x14xf32>
    %153 = vector.shape_cast %152 : vector<1x3x1x14xf32> to vector<3x14xf32>
    %c1_175 = arith.constant 1 : index
    %c0_176 = arith.constant 0 : index
    %c112_177 = arith.constant 112 : index
    %154 = vector.load %arg10[%c1_175, %c0_176, %c112_177] : memref<2x8x256xf32, #tpu.memory_space<vmem>>, vector<1x3x14xf32>
    %155 = vector.shape_cast %154 : vector<1x3x14xf32> to vector<3x14xf32>
    %156 = vector.shape_cast %153 : vector<3x14xf32> to vector<1x3x14xf32>
    tpu.vector_store %arg10[%c1_175, %c0_176, %c112_177], %156 {strides = array<i32>} : memref<2x8x256xf32, #tpu.memory_space<vmem>>, vector<1x3x14xf32>,
    %c1_178 = arith.constant 1 : index
    %c0_179 = arith.constant 0 : index
    %c8_180 = arith.constant 8 : index
    %c0_181 = arith.constant 0 : index
    %157 = vector.load %arg5[%c1_178, %c0_179, %c8_180, %c0_181] : memref<2x3x14x14xf32, #tpu.memory_space<vmem>>, vector<1x3x1x14xf32>
    %158 = vector.shape_cast %157 : vector<1x3x1x14xf32> to vector<3x14xf32>
    %c1_182 = arith.constant 1 : index
    %c0_183 = arith.constant 0 : index
    %c128_184 = arith.constant 128 : index
    %159 = vector.load %arg10[%c1_182, %c0_183, %c128_184] : memref<2x8x256xf32, #tpu.memory_space<vmem>>, vector<1x3x14xf32>
    %160 = vector.shape_cast %159 : vector<1x3x14xf32> to vector<3x14xf32>
    %161 = vector.shape_cast %158 : vector<3x14xf32> to vector<1x3x14xf32>
    tpu.vector_store %arg10[%c1_182, %c0_183, %c128_184], %161 {strides = array<i32>} : memref<2x8x256xf32, #tpu.memory_space<vmem>>, vector<1x3x14xf32>,
    %c1_185 = arith.constant 1 : index
    %c0_186 = arith.constant 0 : index
    %c9_187 = arith.constant 9 : index
    %c0_188 = arith.constant 0 : index
    %162 = vector.load %arg5[%c1_185, %c0_186, %c9_187, %c0_188] : memref<2x3x14x14xf32, #tpu.memory_space<vmem>>, vector<1x3x1x14xf32>
    %163 = vector.shape_cast %162 : vector<1x3x1x14xf32> to vector<3x14xf32>
    %c1_189 = arith.constant 1 : index
    %c0_190 = arith.constant 0 : index
    %c144_191 = arith.constant 144 : index
    %164 = vector.load %arg10[%c1_189, %c0_190, %c144_191] : memref<2x8x256xf32, #tpu.memory_space<vmem>>, vector<1x3x14xf32>
    %165 = vector.shape_cast %164 : vector<1x3x14xf32> to vector<3x14xf32>
    %166 = vector.shape_cast %163 : vector<3x14xf32> to vector<1x3x14xf32>
    tpu.vector_store %arg10[%c1_189, %c0_190, %c144_191], %166 {strides = array<i32>} : memref<2x8x256xf32, #tpu.memory_space<vmem>>, vector<1x3x14xf32>,
    %c1_192 = arith.constant 1 : index
    %c0_193 = arith.constant 0 : index
    %c10_194 = arith.constant 10 : index
    %c0_195 = arith.constant 0 : index
    %167 = vector.load %arg5[%c1_192, %c0_193, %c10_194, %c0_195] : memref<2x3x14x14xf32, #tpu.memory_space<vmem>>, vector<1x3x1x14xf32>
    %168 = vector.shape_cast %167 : vector<1x3x1x14xf32> to vector<3x14xf32>
    %c1_196 = arith.constant 1 : index
    %c0_197 = arith.constant 0 : index
    %c160_198 = arith.constant 160 : index
    %169 = vector.load %arg10[%c1_196, %c0_197, %c160_198] : memref<2x8x256xf32, #tpu.memory_space<vmem>>, vector<1x3x14xf32>
    %170 = vector.shape_cast %169 : vector<1x3x14xf32> to vector<3x14xf32>
    %171 = vector.shape_cast %168 : vector<3x14xf32> to vector<1x3x14xf32>
    tpu.vector_store %arg10[%c1_196, %c0_197, %c160_198], %171 {strides = array<i32>} : memref<2x8x256xf32, #tpu.memory_space<vmem>>, vector<1x3x14xf32>,
    %c1_199 = arith.constant 1 : index
    %c0_200 = arith.constant 0 : index
    %c11_201 = arith.constant 11 : index
    %c0_202 = arith.constant 0 : index
    %172 = vector.load %arg5[%c1_199, %c0_200, %c11_201, %c0_202] : memref<2x3x14x14xf32, #tpu.memory_space<vmem>>, vector<1x3x1x14xf32>
    %173 = vector.shape_cast %172 : vector<1x3x1x14xf32> to vector<3x14xf32>
    %c1_203 = arith.constant 1 : index
    %c0_204 = arith.constant 0 : index
    %c176_205 = arith.constant 176 : index
    %174 = vector.load %arg10[%c1_203, %c0_204, %c176_205] : memref<2x8x256xf32, #tpu.memory_space<vmem>>, vector<1x3x14xf32>
    %175 = vector.shape_cast %174 : vector<1x3x14xf32> to vector<3x14xf32>
    %176 = vector.shape_cast %173 : vector<3x14xf32> to vector<1x3x14xf32>
    tpu.vector_store %arg10[%c1_203, %c0_204, %c176_205], %176 {strides = array<i32>} : memref<2x8x256xf32, #tpu.memory_space<vmem>>, vector<1x3x14xf32>,
    %c1_206 = arith.constant 1 : index
    %c0_207 = arith.constant 0 : index
    %c12_208 = arith.constant 12 : index
    %c0_209 = arith.constant 0 : index
    %177 = vector.load %arg5[%c1_206, %c0_207, %c12_208, %c0_209] : memref<2x3x14x14xf32, #tpu.memory_space<vmem>>, vector<1x3x1x14xf32>
    %178 = vector.shape_cast %177 : vector<1x3x1x14xf32> to vector<3x14xf32>
    %c1_210 = arith.constant 1 : index
    %c0_211 = arith.constant 0 : index
    %c192_212 = arith.constant 192 : index
    %179 = vector.load %arg10[%c1_210, %c0_211, %c192_212] : memref<2x8x256xf32, #tpu.memory_space<vmem>>, vector<1x3x14xf32>
    %180 = vector.shape_cast %179 : vector<1x3x14xf32> to vector<3x14xf32>
    %181 = vector.shape_cast %178 : vector<3x14xf32> to vector<1x3x14xf32>
    tpu.vector_store %arg10[%c1_210, %c0_211, %c192_212], %181 {strides = array<i32>} : memref<2x8x256xf32, #tpu.memory_space<vmem>>, vector<1x3x14xf32>,
    %c1_213 = arith.constant 1 : index
    %c0_214 = arith.constant 0 : index
    %c13_215 = arith.constant 13 : index
    %c0_216 = arith.constant 0 : index
    %182 = vector.load %arg5[%c1_213, %c0_214, %c13_215, %c0_216] : memref<2x3x14x14xf32, #tpu.memory_space<vmem>>, vector<1x3x1x14xf32>
    %183 = vector.shape_cast %182 : vector<1x3x1x14xf32> to vector<3x14xf32>
    %c1_217 = arith.constant 1 : index
    %c0_218 = arith.constant 0 : index
    %c208_219 = arith.constant 208 : index
    %184 = vector.load %arg10[%c1_217, %c0_218, %c208_219] : memref<2x8x256xf32, #tpu.memory_space<vmem>>, vector<1x3x14xf32>
    %185 = vector.shape_cast %184 : vector<1x3x14xf32> to vector<3x14xf32>
    %186 = vector.shape_cast %183 : vector<3x14xf32> to vector<1x3x14xf32>
    tpu.vector_store %arg10[%c1_217, %c0_218, %c208_219], %186 {strides = array<i32>} : memref<2x8x256xf32, #tpu.memory_space<vmem>>, vector<1x3x14xf32>,
    %c1_220 = arith.constant 1 : index
    %c0_221 = arith.constant 0 : index
    %c0_222 = arith.constant 0 : index
    %187 = vector.load %arg10[%c1_220, %c0_221, %c0_222] : memref<2x8x256xf32, #tpu.memory_space<vmem>>, vector<1x8x256xf32>
    %188 = vector.shape_cast %187 : vector<1x8x256xf32> to vector<8x256xf32>
    %189 = vector.broadcast %4 : vector<8x1xf32> to vector<8x256xf32>
    %190 = arith.mulf %188, %189 : vector<8x256xf32>
    %191 = arith.addf %190, %5 : vector<8x256xf32>
    %c1_223 = arith.constant 1 : index
    %c0_224 = arith.constant 0 : index
    %c0_225 = arith.constant 0 : index
    %192 = vector.load %arg10[%c1_223, %c0_224, %c0_225] : memref<2x8x256xf32, #tpu.memory_space<vmem>>, vector<1x8x256xf32>
    %193 = vector.shape_cast %192 : vector<1x8x256xf32> to vector<8x256xf32>
    %194 = vector.shape_cast %191 : vector<8x256xf32> to vector<1x8x256xf32>
    tpu.vector_store %arg10[%c1_223, %c0_224, %c0_225], %194 {strides = array<i32>} : memref<2x8x256xf32, #tpu.memory_space<vmem>>, vector<1x8x256xf32>,
    %c0_226 = arith.constant 0 : index
    %c17_227 = arith.constant 17 : index
    %195 = vector.load %arg13[%c0_226, %c17_227] : memref<8x290xf32, #tpu.memory_space<vmem>>, vector<8x256xf32>
    tpu.vector_store %arg13[%c0_226, %c17_227], %191 {strides = array<i32>} : memref<8x290xf32, #tpu.memory_space<vmem>>, vector<8x256xf32>,
    %c0_228 = arith.constant 0 : index
    %c0_229 = arith.constant 0 : index
    %196 = vector.load %arg13[%c0_228, %c0_229] : memref<8x290xf32, #tpu.memory_space<vmem>>, vector<8x256xf32>
    %197 = vector.broadcast %6 : vector<1x256xf32> to vector<8x256xf32>
    %198 = arith.mulf %196, %197 : vector<8x256xf32>
    %c0_230 = arith.constant 0 : index
    %c256 = arith.constant 256 : index
    %199 = vector.load %arg14[%c0_230, %c256] : memref<72x512xf32, #tpu.memory_space<vmem>>, vector<8x256xf32>
    tpu.vector_store %arg14[%c0_230, %c256], %198 {strides = array<i32>} : memref<72x512xf32, #tpu.memory_space<vmem>>, vector<8x256xf32>,
    %c0_231 = arith.constant 0 : index
    %c1_232 = arith.constant 1 : index
    %200 = vector.load %arg13[%c0_231, %c1_232] : memref<8x290xf32, #tpu.memory_space<vmem>>, vector<8x256xf32>
    %c8_233 = arith.constant 8 : index
    %c256_234 = arith.constant 256 : index
    %201 = vector.load %arg14[%c8_233, %c256_234] : memref<72x512xf32, #tpu.memory_space<vmem>>, vector<8x256xf32>
    tpu.vector_store %arg14[%c8_233, %c256_234], %200 {strides = array<i32>} : memref<72x512xf32, #tpu.memory_space<vmem>>, vector<8x256xf32>,
    %c0_235 = arith.constant 0 : index
    %c2_236 = arith.constant 2 : index
    %202 = vector.load %arg13[%c0_235, %c2_236] : memref<8x290xf32, #tpu.memory_space<vmem>>, vector<8x256xf32>
    %203 = vector.broadcast %7 : vector<1x256xf32> to vector<8x256xf32>
    %204 = arith.mulf %202, %203 : vector<8x256xf32>
    %c16_237 = arith.constant 16 : index
    %c256_238 = arith.constant 256 : index
    %205 = vector.load %arg14[%c16_237, %c256_238] : memref<72x512xf32, #tpu.memory_space<vmem>>, vector<8x256xf32>
    tpu.vector_store %arg14[%c16_237, %c256_238], %204 {strides = array<i32>} : memref<72x512xf32, #tpu.memory_space<vmem>>, vector<8x256xf32>,
    %c0_239 = arith.constant 0 : index
    %c16_240 = arith.constant 16 : index
    %206 = vector.load %arg13[%c0_239, %c16_240] : memref<8x290xf32, #tpu.memory_space<vmem>>, vector<8x256xf32>
    %207 = vector.broadcast %6 : vector<1x256xf32> to vector<8x256xf32>
    %208 = arith.mulf %206, %207 : vector<8x256xf32>
    %c24_241 = arith.constant 24 : index
    %c256_242 = arith.constant 256 : index
    %209 = vector.load %arg14[%c24_241, %c256_242] : memref<72x512xf32, #tpu.memory_space<vmem>>, vector<8x256xf32>
    tpu.vector_store %arg14[%c24_241, %c256_242], %208 {strides = array<i32>} : memref<72x512xf32, #tpu.memory_space<vmem>>, vector<8x256xf32>,
    %c0_243 = arith.constant 0 : index
    %c17_244 = arith.constant 17 : index
    %210 = vector.load %arg13[%c0_243, %c17_244] : memref<8x290xf32, #tpu.memory_space<vmem>>, vector<8x256xf32>
    %c32_245 = arith.constant 32 : index
    %c256_246 = arith.constant 256 : index
    %211 = vector.load %arg14[%c32_245, %c256_246] : memref<72x512xf32, #tpu.memory_space<vmem>>, vector<8x256xf32>
    tpu.vector_store %arg14[%c32_245, %c256_246], %210 {strides = array<i32>} : memref<72x512xf32, #tpu.memory_space<vmem>>, vector<8x256xf32>,
    %c0_247 = arith.constant 0 : index
    %c18_248 = arith.constant 18 : index
    %212 = vector.load %arg13[%c0_247, %c18_248] : memref<8x290xf32, #tpu.memory_space<vmem>>, vector<8x256xf32>
    %213 = vector.broadcast %7 : vector<1x256xf32> to vector<8x256xf32>
    %214 = arith.mulf %212, %213 : vector<8x256xf32>
    %c40_249 = arith.constant 40 : index
    %c256_250 = arith.constant 256 : index
    %215 = vector.load %arg14[%c40_249, %c256_250] : memref<72x512xf32, #tpu.memory_space<vmem>>, vector<8x256xf32>
    tpu.vector_store %arg14[%c40_249, %c256_250], %214 {strides = array<i32>} : memref<72x512xf32, #tpu.memory_space<vmem>>, vector<8x256xf32>,
    %c0_251 = arith.constant 0 : index
    %c32_252 = arith.constant 32 : index
    %216 = vector.load %arg13[%c0_251, %c32_252] : memref<8x290xf32, #tpu.memory_space<vmem>>, vector<8x256xf32>
    %217 = vector.broadcast %6 : vector<1x256xf32> to vector<8x256xf32>
    %218 = arith.mulf %216, %217 : vector<8x256xf32>
    %c48_253 = arith.constant 48 : index
    %c256_254 = arith.constant 256 : index
    %219 = vector.load %arg14[%c48_253, %c256_254] : memref<72x512xf32, #tpu.memory_space<vmem>>, vector<8x256xf32>
    tpu.vector_store %arg14[%c48_253, %c256_254], %218 {strides = array<i32>} : memref<72x512xf32, #tpu.memory_space<vmem>>, vector<8x256xf32>,
    %c0_255 = arith.constant 0 : index
    %c33_256 = arith.constant 33 : index
    %220 = vector.load %arg13[%c0_255, %c33_256] : memref<8x290xf32, #tpu.memory_space<vmem>>, vector<8x256xf32>
    %c56_257 = arith.constant 56 : index
    %c256_258 = arith.constant 256 : index
    %221 = vector.load %arg14[%c56_257, %c256_258] : memref<72x512xf32, #tpu.memory_space<vmem>>, vector<8x256xf32>
    tpu.vector_store %arg14[%c56_257, %c256_258], %220 {strides = array<i32>} : memref<72x512xf32, #tpu.memory_space<vmem>>, vector<8x256xf32>,
    %c0_259 = arith.constant 0 : index
    %c34_260 = arith.constant 34 : index
    %222 = vector.load %arg13[%c0_259, %c34_260] : memref<8x290xf32, #tpu.memory_space<vmem>>, vector<8x256xf32>
    %223 = vector.broadcast %7 : vector<1x256xf32> to vector<8x256xf32>
    %224 = arith.mulf %222, %223 : vector<8x256xf32>
    %c64_261 = arith.constant 64 : index
    %c256_262 = arith.constant 256 : index
    %225 = vector.load %arg14[%c64_261, %c256_262] : memref<72x512xf32, #tpu.memory_space<vmem>>, vector<8x256xf32>
    tpu.vector_store %arg14[%c64_261, %c256_262], %224 {strides = array<i32>} : memref<72x512xf32, #tpu.memory_space<vmem>>, vector<8x256xf32>,
    %c0_263 = arith.constant 0 : index
    %c0_264 = arith.constant 0 : index
    %226 = vector.load %arg14[%c0_263, %c0_264] : memref<72x512xf32, #tpu.memory_space<vmem>>, vector<72x512xf32>
    %227 = arith.truncf %226 : vector<72x512xf32> to vector<72x512xbf16>
    %c0_265 = arith.constant 0 : index
    %c0_266 = arith.constant 0 : index
    %228 = vector.load %arg6[%c0_265, %c0_266] : memref<32x72xbf16, #tpu.memory_space<vmem>>, vector<32x72xbf16>
    %cst_267 = arith.constant dense<0.000000e+00> : vector<32x512xf32>
    %229 = tpu.matmul %228, %227, %cst_267 {dimension_numbers = #tpu.dot_dimension_numbers<[1], [0], [0], [1], [0, 0, 1, 1], [], []>} : vector<32x72xbf16>, vector<72x512xbf16>, vector<32x512xf32> -> vector<32x512xf32>
    %c0_268 = arith.constant 0 : index
    %c0_269 = arith.constant 0 : index
    %230 = vector.load %arg7[%c0_268, %c0_269] : memref<32x1xf32, #tpu.memory_space<vmem>>, vector<32x1xf32>
    %231 = vector.broadcast %230 : vector<32x1xf32> to vector<32x512xf32>
    %232 = arith.addf %229, %231 : vector<32x512xf32>
    %cst_270 = arith.constant 0.000000e+00 : f32
    %233 = vector.broadcast %cst_270 : f32 to vector<32x512xf32>
    %234 = arith.maximumf %232, %233 : vector<32x512xf32>
    %c0_271 = arith.constant 0 : index
    %c0_272 = arith.constant 0 : index
    %235 = vector.load %arg8[%c0_271, %c0_272] : memref<8x32xbf16, #tpu.memory_space<vmem>>, vector<8x32xbf16>
    %236 = arith.truncf %234 : vector<32x512xf32> to vector<32x512xbf16>
    %cst_273 = arith.constant dense<0.000000e+00> : vector<8x512xf32>
    %237 = tpu.matmul %235, %236, %cst_273 {dimension_numbers = #tpu.dot_dimension_numbers<[1], [0], [0], [1], [0, 0, 1, 1], [], []>} : vector<8x32xbf16>, vector<32x512xbf16>, vector<8x512xf32> -> vector<8x512xf32>
    %c0_274 = arith.constant 0 : index
    %c0_275 = arith.constant 0 : index
    %238 = vector.load %arg9[%c0_274, %c0_275] : memref<8x1xf32, #tpu.memory_space<vmem>>, vector<8x1xf32>
    %239 = vector.broadcast %238 : vector<8x1xf32> to vector<8x512xf32>
    %240 = arith.addf %237, %239 : vector<8x512xf32>
    %241 = vector.extract_strided_slice %234 {offsets = [0, 0], sizes = [32, 256], strides = [1, 1]} : vector<32x512xf32> to vector<32x256xf32>
    %242 = arith.truncf %241 : vector<32x256xf32> to vector<32x256xbf16>
    %c0_276 = arith.constant 0 : index
    %c0_277 = arith.constant 0 : index
    %c0_278 = arith.constant 0 : index
    %243 = vector.load %arg11[%c0_276, %c0_277, %c0_278] : memref<2x32x256xbf16, #tpu.memory_space<vmem>>, vector<1x32x256xbf16>
    %244 = vector.shape_cast %243 : vector<1x32x256xbf16> to vector<32x256xbf16>
    %245 = vector.shape_cast %242 : vector<32x256xbf16> to vector<1x32x256xbf16>
    tpu.vector_store %arg11[%c0_276, %c0_277, %c0_278], %245 {strides = array<i32>} : memref<2x32x256xbf16, #tpu.memory_space<vmem>>, vector<1x32x256xbf16>,
    %246 = vector.extract_strided_slice %240 {offsets = [0, 0], sizes = [8, 256], strides = [1, 1]} : vector<8x512xf32> to vector<8x256xf32>
    %247 = arith.truncf %246 : vector<8x256xf32> to vector<8x256xbf16>
    %c0_279 = arith.constant 0 : index
    %c0_280 = arith.constant 0 : index
    %c0_281 = arith.constant 0 : index
    %248 = vector.load %arg12[%c0_279, %c0_280, %c0_281] : memref<2x8x256xbf16, #tpu.memory_space<vmem>>, vector<1x8x256xbf16>
    %249 = vector.shape_cast %248 : vector<1x8x256xbf16> to vector<8x256xbf16>
    %250 = vector.shape_cast %247 : vector<8x256xbf16> to vector<1x8x256xbf16>
    tpu.vector_store %arg12[%c0_279, %c0_280, %c0_281], %250 {strides = array<i32>} : memref<2x8x256xbf16, #tpu.memory_space<vmem>>, vector<1x8x256xbf16>,
    %251 = vector.extract_strided_slice %234 {offsets = [0, 256], sizes = [32, 256], strides = [1, 1]} : vector<32x512xf32> to vector<32x256xf32>
    %252 = arith.truncf %251 : vector<32x256xf32> to vector<32x256xbf16>
    %c1_282 = arith.constant 1 : index
    %c0_283 = arith.constant 0 : index
    %c0_284 = arith.constant 0 : index
    %253 = vector.load %arg11[%c1_282, %c0_283, %c0_284] : memref<2x32x256xbf16, #tpu.memory_space<vmem>>, vector<1x32x256xbf16>
    %254 = vector.shape_cast %253 : vector<1x32x256xbf16> to vector<32x256xbf16>
    %255 = vector.shape_cast %252 : vector<32x256xbf16> to vector<1x32x256xbf16>
    tpu.vector_store %arg11[%c1_282, %c0_283, %c0_284], %255 {strides = array<i32>} : memref<2x32x256xbf16, #tpu.memory_space<vmem>>, vector<1x32x256xbf16>,
    %256 = vector.extract_strided_slice %240 {offsets = [0, 256], sizes = [8, 256], strides = [1, 1]} : vector<8x512xf32> to vector<8x256xf32>
    %257 = arith.truncf %256 : vector<8x256xf32> to vector<8x256xbf16>
    %c1_285 = arith.constant 1 : index
    %c0_286 = arith.constant 0 : index
    %c0_287 = arith.constant 0 : index
    %258 = vector.load %arg12[%c1_285, %c0_286, %c0_287] : memref<2x8x256xbf16, #tpu.memory_space<vmem>>, vector<1x8x256xbf16>
    %259 = vector.shape_cast %258 : vector<1x8x256xbf16> to vector<8x256xbf16>
    %260 = vector.shape_cast %257 : vector<8x256xbf16> to vector<1x8x256xbf16>
    tpu.vector_store %arg12[%c1_285, %c0_286, %c0_287], %260 {strides = array<i32>} : memref<2x8x256xbf16, #tpu.memory_space<vmem>>, vector<1x8x256xbf16>,
    return
  }
  func.func @transform_0(%arg0: i32) -> (i32, i32) {
    %c0_i32 = arith.constant 0 : i32
    %c0_i32_0 = arith.constant 0 : i32
    %c0_i32_1 = arith.constant 0 : i32
    return %c0_i32, %c0_i32_0 : i32, i32
  }
  func.func @transform_1(%arg0: i32) -> (i32, i32) {
    %c0_i32 = arith.constant 0 : i32
    %c0_i32_0 = arith.constant 0 : i32
    %c0_i32_1 = arith.constant 0 : i32
    return %c0_i32, %c0_i32_0 : i32, i32
  }
  func.func @transform_2(%arg0: i32) -> (i32, i32) {
    %c0_i32 = arith.constant 0 : i32
    %c0_i32_0 = arith.constant 0 : i32
    %c0_i32_1 = arith.constant 0 : i32
    return %c0_i32, %c0_i32_0 : i32, i32
  }
  func.func @transform_3(%arg0: i32) -> (i32, i32) {
    %c0_i32 = arith.constant 0 : i32
    %c0_i32_0 = arith.constant 0 : i32
    %c0_i32_1 = arith.constant 0 : i32
    return %c0_i32, %c0_i32_0 : i32, i32
  }
  func.func @transform_4(%arg0: i32) -> (i32, i32, i32, i32) {
    %c0_i32 = arith.constant 0 : i32
    %c0_i32_0 = arith.constant 0 : i32
    %c0_i32_1 = arith.constant 0 : i32
    %c0_i32_2 = arith.constant 0 : i32
    return %arg0, %c0_i32, %c0_i32_0, %c0_i32_1 : i32, i32, i32, i32
  }
  func.func @transform_5(%arg0: i32) -> (i32, i32) {
    %c0_i32 = arith.constant 0 : i32
    %c0_i32_0 = arith.constant 0 : i32
    %c0_i32_1 = arith.constant 0 : i32
    return %c0_i32, %c0_i32_0 : i32, i32
  }
  func.func @transform_6(%arg0: i32) -> (i32, i32) {
    %c0_i32 = arith.constant 0 : i32
    %c0_i32_0 = arith.constant 0 : i32
    %c0_i32_1 = arith.constant 0 : i32
    return %c0_i32, %c0_i32_0 : i32, i32
  }
  func.func @transform_7(%arg0: i32) -> (i32, i32) {
    %c0_i32 = arith.constant 0 : i32
    %c0_i32_0 = arith.constant 0 : i32
    %c0_i32_1 = arith.constant 0 : i32
    return %c0_i32, %c0_i32_0 : i32, i32
  }
  func.func @transform_8(%arg0: i32) -> (i32, i32) {
    %c0_i32 = arith.constant 0 : i32
    %c0_i32_0 = arith.constant 0 : i32
    %c0_i32_1 = arith.constant 0 : i32
    return %c0_i32, %c0_i32_0 : i32, i32
  }
  func.func @transform_9(%arg0: i32) -> (i32, i32, i32) {
    %c0_i32 = arith.constant 0 : i32
    %c0_i32_0 = arith.constant 0 : i32
    %c0_i32_1 = arith.constant 0 : i32
    return %arg0, %c0_i32, %c0_i32_0 : i32, i32, i32
  }
  func.func @transform_10(%arg0: i32) -> (i32, i32, i32) {
    %c0_i32 = arith.constant 0 : i32
    %c0_i32_0 = arith.constant 0 : i32
    %c0_i32_1 = arith.constant 0 : i32
    return %arg0, %c0_i32, %c0_i32_0 : i32, i32, i32
  }
  func.func @transform_11(%arg0: i32) -> (i32, i32, i32) {
    %c0_i32 = arith.constant 0 : i32
    %c0_i32_0 = arith.constant 0 : i32
    %c0_i32_1 = arith.constant 0 : i32
    return %arg0, %c0_i32, %c0_i32_0 : i32, i32, i32
  }
}

</mosaic_0001>

<llo_original>
// kernel: offline_ae_forward.1
$region0: #{offline_ae_forward.1}
  #allocation0 [shape = 'u32[]', space=smem, size = 0x4, offset = 0x4, fixed_abs, tag = 'smem constant byte address 0x4 - core index']
  #allocation1 [shape = 'u32[144,128]{1,0:T(1,128)}', space=vmem, size = 0x12000, scoped, tag = 'internal scratch']
  #allocation2 [shape = 'f32[8,290]{1,0:T(8,128)}', space=vmem, size = 0x3000, scoped, tag = 'scratch operand']
  #allocation3 [shape = 'f32[72,512]{1,0:T(8,128)}', space=vmem, size = 0x24000, scoped, tag = 'scratch operand']
  %s0 = inlined_call_operand.vmem [shape: f32[8,1], index: 0, kind: input, shape index: {}]
  %s1 = inlined_call_operand.vmem [shape: f32[8,256], index: 1, kind: input, shape index: {}]
  %s2 = inlined_call_operand.vmem [shape: f32[1,256], index: 2, kind: input, shape index: {}]
  %s3 = inlined_call_operand.vmem [shape: f32[1,256], index: 3, kind: input, shape index: {}]
  %s4 = inlined_call_operand.vmem [shape: f32[4,3,14,14], index: 4, kind: input, shape index: {}]
  %s5 = inlined_call_operand.vmem [shape: bf16[32,72], index: 5, kind: input, shape index: {}]
  %s6 = inlined_call_operand.vmem [shape: f32[32,1], index: 6, kind: input, shape index: {}]
  %s7 = inlined_call_operand.vmem [shape: bf16[8,32], index: 7, kind: input, shape index: {}]
  %s8 = inlined_call_operand.vmem [shape: f32[8,1], index: 8, kind: input, shape index: {}]
  %s9 = inlined_call_operand.vmem [shape: f32[4,8,256], index: 9, kind: output, shape index: {0}]
  %s10 = inlined_call_operand.vmem [shape: bf16[4,32,256], index: 10, kind: output, shape index: {1}]
  %s11 = inlined_call_operand.vmem [shape: bf16[4,8,256], index: 11, kind: output, shape index: {2}]
  %12 = xla_tuple %s9, %s10, %s11
  %s13 = sld [smem:[#allocation0]]
  $region85: #{offline_ae_forward.1} parent=0
    _
  %s15 = ssub.s32 1, %s13
  %s16 = scalar_select 0, %s15, %s13
  loop: start=0, step=1, limit=4
  $region2: #{offline_ae_forward.1} parent=0 // loop_pre_header
    _
  $region3: #{offline_ae_forward.1} parent=0 // loop_header
    %s18 = sphi 0, %s22
    %p19 = scmp.ge.s32.totalorder %s18, 4
    %s26 = sphi 0, %s26
    %s28 = sphi 0, %s26
    %s29 = sphi 0, %s28
    %s43 = sphi 0, %s29
    %s47 = sphi 0, %s47
    %s49 = sphi 0, %s47
    %s50 = sphi 0, %s49
    %s64 = sphi 0, %s50
    %s68 = sphi 0, %s68
    %s70 = sphi 0, %s68
    %s71 = sphi 0, %s70
    %s85 = sphi 0, %s71
    %s89 = sphi 0, %s89
    %s91 = sphi 0, %s89
    %s92 = sphi 0, %s91
    %s106 = sphi 0, %s92
    %s112 = sphi 0, %s114
    %s115 = sphi 0, %s112
    %s116 = sphi 0, %s115
    %s132 = sphi 0, %s116
    %s136 = sphi 0, %s136
    %s138 = sphi 0, %s136
    %s139 = sphi 0, %s138
    %s153 = sphi 0, %s139
    %s157 = sphi 0, %s157
    %s159 = sphi 0, %s157
    %s160 = sphi 0, %s159
    %s174 = sphi 0, %s160
    %s178 = sphi 0, %s178
    %s180 = sphi 0, %s178
    %s181 = sphi 0, %s180
    %s195 = sphi 0, %s181
    %s199 = sphi 0, %s199
    %s201 = sphi 0, %s199
    %s202 = sphi 0, %s201
    %s216 = sphi 0, %s202
    %s222 = sphi 0, %s224
    %s225 = sphi 0, %s222
    %s226 = sphi 0, %s225
    %s242 = sphi 0, %s226
    %s248 = sphi 0, %s250
    %s251 = sphi 0, %s248
    %s252 = sphi 0, %s251
    %s268 = sphi 0, %s252
    %s274 = sphi 0, %s276
    %s277 = sphi 0, %s274
    %s278 = sphi 0, %s277
    %s294 = sphi 0, %s278
  $region4: #{offline_ae_forward.1} parent=0 // loop_header_branch
    %21 = sbr.rel (%p19) target = $region8
  $region5: #{offline_ae_forward.1} parent=0 // loop_body
    %s23 = ssub.s32 %s18, 1
    %s24 = ssub.s32 %s18, 2
    %s25 = sadd.s32 %s18, 1
    %s27 = sadd.s32 %s26, 1
    %p30 = scmp.eq.s32.totalorder %s18, 1
    %p31 = scmp.ne.s32.totalorder %s26, %s28
    %p32 = scmp.eq.s32.totalorder %s18, 0
    %p33 = por %p31, %p32
    %p34 = scmp.ne.s32.totalorder %s26, %s28
    %p35 = scmp.eq.s32.totalorder %s23, 1
    %p36 = por %p34, %p35
    %p37 = scmp.ne.s32.totalorder %s28, %s29
    %p38 = scmp.eq.s32.totalorder %s23, 0
    %p39 = por %p37, %p38
    %p40 = scmp.ne.s32.totalorder %s28, %s29
    %p41 = scmp.eq.s32.totalorder %s24, 1
    %p42 = por %p40, %p41
    %p44 = scmp.ne.s32.totalorder %s29, %s43
    %p45 = scmp.eq.s32.totalorder %s24, 0
    %p46 = por %p44, %p45
    %s48 = sadd.s32 %s47, 1
    %p51 = scmp.eq.s32.totalorder %s18, 1
    %p52 = scmp.ne.s32.totalorder %s47, %s49
    %p53 = scmp.eq.s32.totalorder %s18, 0
    %p54 = por %p52, %p53
    %p55 = scmp.ne.s32.totalorder %s47, %s49
    %p56 = scmp.eq.s32.totalorder %s23, 1
    %p57 = por %p55, %p56
    %p58 = scmp.ne.s32.totalorder %s49, %s50
    %p59 = scmp.eq.s32.totalorder %s23, 0
    %p60 = por %p58, %p59
    %p61 = scmp.ne.s32.totalorder %s49, %s50
    %p62 = scmp.eq.s32.totalorder %s24, 1
    %p63 = por %p61, %p62
    %p65 = scmp.ne.s32.totalorder %s50, %s64
    %p66 = scmp.eq.s32.totalorder %s24, 0
    %p67 = por %p65, %p66
    %s69 = sadd.s32 %s68, 1
    %p72 = scmp.eq.s32.totalorder %s18, 1
    %p73 = scmp.ne.s32.totalorder %s68, %s70
    %p74 = scmp.eq.s32.totalorder %s18, 0
    %p75 = por %p73, %p74
    %p76 = scmp.ne.s32.totalorder %s68, %s70
    %p77 = scmp.eq.s32.totalorder %s23, 1
    %p78 = por %p76, %p77
    %p79 = scmp.ne.s32.totalorder %s70, %s71
    %p80 = scmp.eq.s32.totalorder %s23, 0
    %p81 = por %p79, %p80
    %p82 = scmp.ne.s32.totalorder %s70, %s71
    %p83 = scmp.eq.s32.totalorder %s24, 1
    %p84 = por %p82, %p83
    %p86 = scmp.ne.s32.totalorder %s71, %s85
    %p87 = scmp.eq.s32.totalorder %s24, 0
    %p88 = por %p86, %p87
    %s90 = sadd.s32 %s89, 1
    %p93 = scmp.eq.s32.totalorder %s18, 1
    %p94 = scmp.ne.s32.totalorder %s89, %s91
    %p95 = scmp.eq.s32.totalorder %s18, 0
    %p96 = por %p94, %p95
    %p97 = scmp.ne.s32.totalorder %s89, %s91
    %p98 = scmp.eq.s32.totalorder %s23, 1
    %p99 = por %p97, %p98
    %p100 = scmp.ne.s32.totalorder %s91, %s92
    %p101 = scmp.eq.s32.totalorder %s23, 0
    %p102 = por %p100, %p101
    %p103 = scmp.ne.s32.totalorder %s91, %s92
    %p104 = scmp.eq.s32.totalorder %s24, 1
    %p105 = por %p103, %p104
    %p107 = scmp.ne.s32.totalorder %s92, %s106
    %p108 = scmp.eq.s32.totalorder %s24, 0
    %p109 = por %p107, %p108
    %s110 = ssub.s32 %s18, %s25
    %p111 = scmp.eq.s32.totalorder %s110, 0
    %s113 = sadd.s32 %s112, 1
    %s114 = scalar_select %p111, %s112, %s113
    %p117 = pneg %p111
    %p118 = scmp.eq.s32.totalorder %s18, 1
    %p119 = por %p117, %p118
    %p120 = scmp.ne.s32.totalorder %s112, %s115
    %p121 = scmp.eq.s32.totalorder %s18, 0
    %p122 = por %p120, %p121
    %p123 = scmp.ne.s32.totalorder %s112, %s115
    %p124 = scmp.eq.s32.totalorder %s23, 1
    %p125 = por %p123, %p124
    %p126 = scmp.ne.s32.totalorder %s115, %s116
    %p127 = scmp.eq.s32.totalorder %s23, 0
    %p128 = por %p126, %p127
    %p129 = scmp.ne.s32.totalorder %s115, %s116
    %p130 = scmp.eq.s32.totalorder %s24, 1
    %p131 = por %p129, %p130
    %p133 = scmp.ne.s32.totalorder %s116, %s132
    %p134 = scmp.eq.s32.totalorder %s24, 0
    %p135 = por %p133, %p134
    %s137 = sadd.s32 %s136, 1
    %p140 = scmp.eq.s32.totalorder %s18, 1
    %p141 = scmp.ne.s32.totalorder %s136, %s138
    %p142 = scmp.eq.s32.totalorder %s18, 0
    %p143 = por %p141, %p142
    %p144 = scmp.ne.s32.totalorder %s136, %s138
    %p145 = scmp.eq.s32.totalorder %s23, 1
    %p146 = por %p144, %p145
    %p147 = scmp.ne.s32.totalorder %s138, %s139
    %p148 = scmp.eq.s32.totalorder %s23, 0
    %p149 = por %p147, %p148
    %p150 = scmp.ne.s32.totalorder %s138, %s139
    %p151 = scmp.eq.s32.totalorder %s24, 1
    %p152 = por %p150, %p151
    %p154 = scmp.ne.s32.totalorder %s139, %s153
    %p155 = scmp.eq.s32.totalorder %s24, 0
    %p156 = por %p154, %p155
    %s158 = sadd.s32 %s157, 1
    %p161 = scmp.eq.s32.totalorder %s18, 1
    %p162 = scmp.ne.s32.totalorder %s157, %s159
    %p163 = scmp.eq.s32.totalorder %s18, 0
    %p164 = por %p162, %p163
    %p165 = scmp.ne.s32.totalorder %s157, %s159
    %p166 = scmp.eq.s32.totalorder %s23, 1
    %p167 = por %p165, %p166
    %p168 = scmp.ne.s32.totalorder %s159, %s160
    %p169 = scmp.eq.s32.totalorder %s23, 0
    %p170 = por %p168, %p169
    %p171 = scmp.ne.s32.totalorder %s159, %s160
    %p172 = scmp.eq.s32.totalorder %s24, 1
    %p173 = por %p171, %p172
    %p175 = scmp.ne.s32.totalorder %s160, %s174
    %p176 = scmp.eq.s32.totalorder %s24, 0
    %p177 = por %p175, %p176
    %s179 = sadd.s32 %s178, 1
    %p182 = scmp.eq.s32.totalorder %s18, 1
    %p183 = scmp.ne.s32.totalorder %s178, %s180
    %p184 = scmp.eq.s32.totalorder %s18, 0
    %p185 = por %p183, %p184
    %p186 = scmp.ne.s32.totalorder %s178, %s180
    %p187 = scmp.eq.s32.totalorder %s23, 1
    %p188 = por %p186, %p187
    %p189 = scmp.ne.s32.totalorder %s180, %s181
    %p190 = scmp.eq.s32.totalorder %s23, 0
    %p191 = por %p189, %p190
    %p192 = scmp.ne.s32.totalorder %s180, %s181
    %p193 = scmp.eq.s32.totalorder %s24, 1
    %p194 = por %p192, %p193
    %p196 = scmp.ne.s32.totalorder %s181, %s195
    %p197 = scmp.eq.s32.totalorder %s24, 0
    %p198 = por %p196, %p197
    %s200 = sadd.s32 %s199, 1
    %p203 = scmp.eq.s32.totalorder %s18, 1
    %p204 = scmp.ne.s32.totalorder %s199, %s201
    %p205 = scmp.eq.s32.totalorder %s18, 0
    %p206 = por %p204, %p205
    %p207 = scmp.ne.s32.totalorder %s199, %s201
    %p208 = scmp.eq.s32.totalorder %s23, 1
    %p209 = por %p207, %p208
    %p210 = scmp.ne.s32.totalorder %s201, %s202
    %p211 = scmp.eq.s32.totalorder %s23, 0
    %p212 = por %p210, %p211
    %p213 = scmp.ne.s32.totalorder %s201, %s202
    %p214 = scmp.eq.s32.totalorder %s24, 1
    %p215 = por %p213, %p214
    %p217 = scmp.ne.s32.totalorder %s202, %s216
    %p218 = scmp.eq.s32.totalorder %s24, 0
    %p219 = por %p217, %p218
    %s220 = ssub.s32 %s18, %s25
    %p221 = scmp.eq.s32.totalorder %s220, 0
    %s223 = sadd.s32 %s222, 1
    %s224 = scalar_select %p221, %s222, %s223
    %p227 = pneg %p221
    %p228 = scmp.eq.s32.totalorder %s18, 1
    %p229 = por %p227, %p228
    %p230 = scmp.ne.s32.totalorder %s222, %s225
    %p231 = scmp.eq.s32.totalorder %s18, 0
    %p232 = por %p230, %p231
    %p233 = scmp.ne.s32.totalorder %s222, %s225
    %p234 = scmp.eq.s32.totalorder %s23, 1
    %p235 = por %p233, %p234
    %p236 = scmp.ne.s32.totalorder %s225, %s226
    %p237 = scmp.eq.s32.totalorder %s23, 0
    %p238 = por %p236, %p237
    %p239 = scmp.ne.s32.totalorder %s225, %s226
    %p240 = scmp.eq.s32.totalorder %s24, 1
    %p241 = por %p239, %p240
    %p243 = scmp.ne.s32.totalorder %s226, %s242
    %p244 = scmp.eq.s32.totalorder %s24, 0
    %p245 = por %p243, %p244
    %s246 = ssub.s32 %s18, %s25
    %p247 = scmp.eq.s32.totalorder %s246, 0
    %s249 = sadd.s32 %s248, 1
    %s250 = scalar_select %p247, %s248, %s249
    %p253 = pneg %p247
    %p254 = scmp.eq.s32.totalorder %s18, 1
    %p255 = por %p253, %p254
    %p256 = scmp.ne.s32.totalorder %s248, %s251
    %p257 = scmp.eq.s32.totalorder %s18, 0
    %p258 = por %p256, %p257
    %p259 = scmp.ne.s32.totalorder %s248, %s251
    %p260 = scmp.eq.s32.totalorder %s23, 1
    %p261 = por %p259, %p260
    %p262 = scmp.ne.s32.totalorder %s251, %s252
    %p263 = scmp.eq.s32.totalorder %s23, 0
    %p264 = por %p262, %p263
    %p265 = scmp.ne.s32.totalorder %s251, %s252
    %p266 = scmp.eq.s32.totalorder %s24, 1
    %p267 = por %p265, %p266
    %p269 = scmp.ne.s32.totalorder %s252, %s268
    %p270 = scmp.eq.s32.totalorder %s24, 0
    %p271 = por %p269, %p270
    %s272 = ssub.s32 %s18, %s25
    %p273 = scmp.eq.s32.totalorder %s272, 0
    %s275 = sadd.s32 %s274, 1
    %s276 = scalar_select %p273, %s274, %s275
    %p279 = pneg %p273
    %p280 = scmp.eq.s32.totalorder %s18, 1
    %p281 = por %p279, %p280
    %p282 = scmp.ne.s32.totalorder %s274, %s277
    %p283 = scmp.eq.s32.totalorder %s18, 0
    %p284 = por %p282, %p283
    %p285 = scmp.ne.s32.totalorder %s274, %s277
    %p286 = scmp.eq.s32.totalorder %s23, 1
    %p287 = por %p285, %p286
    %p288 = scmp.ne.s32.totalorder %s277, %s278
    %p289 = scmp.eq.s32.totalorder %s23, 0
    %p290 = por %p288, %p289
    %p291 = scmp.ne.s32.totalorder %s277, %s278
    %p292 = scmp.eq.s32.totalorder %s24, 1
    %p293 = por %p291, %p292
    %p295 = scmp.ne.s32.totalorder %s278, %s294
    %p296 = scmp.eq.s32.totalorder %s24, 0
    %p297 = por %p295, %p296
    %p298 = scmp.le.s32.totalorder 1, %s18
    %p299 = scmp.lt.s32.totalorder %s18, 3
    %p300 = pnand %p298, %p299
    %p301 = pneg %p300
    // Predicated region
    $region9: #{offline_ae_forward.1} parent=5 // pred_check
      _
    $region10: #{offline_ae_forward.1} parent=5 // pred_check_branch
      %303 = sbr.rel (%p300) target = $region12
    $region11: #{offline_ae_forward.1} parent=5 // pred_region
      %s304 = ssub.s32 %s18, 1
      // Predicated region
      $region13: #{offline_ae_forward.1} parent=11 // pred_check
        %p305 = pneg %p39
      $region14: #{offline_ae_forward.1} parent=11 // pred_check_branch
        %307 = sbr.rel (%p305) target = $region16
      $region15: #{offline_ae_forward.1} parent=11 // pred_region
        _
      $region16: #{offline_ae_forward.1} parent=11 // pred_fallthru
        _
      // Predicated region
      $region17: #{offline_ae_forward.1} parent=11 // pred_check
        %p308 = pneg %p60
      $region18: #{offline_ae_forward.1} parent=11 // pred_check_branch
        %310 = sbr.rel (%p308) target = $region20
      $region19: #{offline_ae_forward.1} parent=11 // pred_region
        _
      $region20: #{offline_ae_forward.1} parent=11 // pred_fallthru
        _
      // Predicated region
      $region21: #{offline_ae_forward.1} parent=11 // pred_check
        %p311 = pneg %p81
      $region22: #{offline_ae_forward.1} parent=11 // pred_check_branch
        %313 = sbr.rel (%p311) target = $region24
      $region23: #{offline_ae_forward.1} parent=11 // pred_region
        _
      $region24: #{offline_ae_forward.1} parent=11 // pred_fallthru
        _
      // Predicated region
      $region25: #{offline_ae_forward.1} parent=11 // pred_check
        %p314 = pneg %p102
      $region26: #{offline_ae_forward.1} parent=11 // pred_check_branch
        %316 = sbr.rel (%p314) target = $region28
      $region27: #{offline_ae_forward.1} parent=11 // pred_region
        _
      $region28: #{offline_ae_forward.1} parent=11 // pred_fallthru
        _
      // Predicated region
      $region29: #{offline_ae_forward.1} parent=11 // pred_check
        %p317 = pneg %p149
      $region30: #{offline_ae_forward.1} parent=11 // pred_check_branch
        %319 = sbr.rel (%p317) target = $region32
      $region31: #{offline_ae_forward.1} parent=11 // pred_region
        _
      $region32: #{offline_ae_forward.1} parent=11 // pred_fallthru
        _
      // Predicated region
      $region33: #{offline_ae_forward.1} parent=11 // pred_check
        %p320 = pneg %p170
      $region34: #{offline_ae_forward.1} parent=11 // pred_check_branch
        %322 = sbr.rel (%p320) target = $region36
      $region35: #{offline_ae_forward.1} parent=11 // pred_region
        _
      $region36: #{offline_ae_forward.1} parent=11 // pred_fallthru
        _
      // Predicated region
      $region37: #{offline_ae_forward.1} parent=11 // pred_check
        %p323 = pneg %p191
      $region38: #{offline_ae_forward.1} parent=11 // pred_check_branch
        %325 = sbr.rel (%p323) target = $region40
      $region39: #{offline_ae_forward.1} parent=11 // pred_region
        _
      $region40: #{offline_ae_forward.1} parent=11 // pred_fallthru
        _
      // Predicated region
      $region41: #{offline_ae_forward.1} parent=11 // pred_check
        %p326 = pneg %p212
      $region42: #{offline_ae_forward.1} parent=11 // pred_check_branch
        %328 = sbr.rel (%p326) target = $region44
      $region43: #{offline_ae_forward.1} parent=11 // pred_region
        _
      $region44: #{offline_ae_forward.1} parent=11 // pred_fallthru
        _
    $region12: #{offline_ae_forward.1} parent=5 // pred_fallthru
      _
    %p329 = scmp.lt.s32.totalorder %s18, 2
    // Predicated region
    $region45: #{offline_ae_forward.1} parent=5 // pred_check
      %p330 = pneg %p329
    $region46: #{offline_ae_forward.1} parent=5 // pred_check_branch
      %332 = sbr.rel (%p330) target = $region48
    $region47: #{offline_ae_forward.1} parent=5 // pred_region
      // Predicated region
      $region49: #{offline_ae_forward.1} parent=47 // pred_check
        %p333 = pneg %p122
      $region50: #{offline_ae_forward.1} parent=47 // pred_check_branch
        %335 = sbr.rel (%p333) target = $region52
      $region51: #{offline_ae_forward.1} parent=47 // pred_region
        %s336 = smul.u32 2, %s18
        %p337 = scmp.lt.s32.totalorder %s336, 3
        %s338 = scalar_select %p337, %s336, 3
        %s339 = smul.addr %s338, 6
        %s340 = smul.addr %s339, 8
        %s341 = scalar_lea.vmem %s4, %s340
        %s342 = smul.u32 2, %s18
      $region52: #{offline_ae_forward.1} parent=47 // pred_fallthru
        _
    $region48: #{offline_ae_forward.1} parent=5 // pred_fallthru
      _
    %p343 = scmp.le.s32.totalorder 1, %s18
    %p344 = scmp.lt.s32.totalorder %s18, 3
    %p345 = pnand %p343, %p344
    %p346 = pneg %p345
    // Predicated region
    $region53: #{offline_ae_forward.1} parent=5 // pred_check
      _
    $region54: #{offline_ae_forward.1} parent=5 // pred_check_branch
      %348 = sbr.rel (%p345) target = $region56
    $region55: #{offline_ae_forward.1} parent=5 // pred_region
      %s349 = ssub.s32 %s18, 1
      %p350 = pneg %p39
      %p351 = pneg %p36
      %p352 = pneg %p60
      %p353 = pneg %p57
      %p354 = pneg %p81
      %p355 = pneg %p78
      %p356 = pneg %p102
      %p357 = pneg %p99
      %s358 = smul.u32 2, %s23
      %p359 = scmp.lt.s32.totalorder %s358, 3
      %s360 = scalar_select %p359, %s358, 3
      %s361 = smul.addr %s360, 6
      %s362 = smul.addr %s361, 8
      %s363 = scalar_lea.vmem %s4, %s362
      %p364 = pneg %p128
      %p365 = pneg %p125
      %p366 = pneg %p149
      %p367 = pneg %p146
      %p368 = pneg %p170
      %p369 = pneg %p167
      %p370 = pneg %p191
      %p371 = pneg %p188
      %p372 = pneg %p212
      %p373 = pneg %p209
      %p374 = pneg %p238
      %p375 = pneg %p235
      %s376 = smul.u32 2, %s23
      %p377 = scmp.lt.s32.totalorder %s376, 3
      %s378 = scalar_select %p377, %s376, 3
      %s379 = smul.addr %s378, 2
      %s380 = smul.addr %s379, 8
      %s381 = scalar_lea.vmem %s9, %s380
      %p382 = pneg %p264
      %p383 = pneg %p261
      %s384 = smul.u32 2, %s23
      %p385 = scmp.lt.s32.totalorder %s384, 3
      %s386 = scalar_select %p385, %s384, 3
      %s387 = smul.addr %s386, 8
      %s388 = smul.addr %s387, 4
      %s389 = scalar_lea.vmem %s10, %s388
      %p390 = pneg %p290
      %p391 = pneg %p287
      %s392 = smul.u32 2, %s23
      %p393 = scmp.lt.s32.totalorder %s392, 3
      %s394 = scalar_select %p393, %s392, 3
      %s395 = smul.addr %s394, 2
      %s396 = smul.addr %s395, 4
      %s397 = scalar_lea.vmem %s11, %s396
      %s398 = smul.u32 2, %s23
      %p399 = scmp.lt.s32.totalorder %s398, 3
      %s400 = scalar_select %p399, %s398, 3
      %s401 = smul.addr %s400, 6
      %s402 = smul.addr %s401, 8
      %s403 = scalar_lea.vmem %s4, %s402
      %s404 = smul.u32 2, %s23
      %s405 = smul.u32 2, %s23
      %p406 = scmp.lt.s32.totalorder %s405, 3
      %s407 = scalar_select %p406, %s405, 3
      %s408 = smul.addr %s407, 2
      %s409 = smul.addr %s408, 8
      %s410 = scalar_lea.vmem %s9, %s409
      %s411 = smul.u32 2, %s23
      %s412 = smul.u32 2, %s23
      %p413 = scmp.lt.s32.totalorder %s412, 3
      %s414 = scalar_select %p413, %s412, 3
      %s415 = smul.addr %s414, 8
      %s416 = smul.addr %s415, 4
      %s417 = scalar_lea.vmem %s10, %s416
      %s418 = smul.u32 2, %s23
      %s419 = smul.u32 2, %s23
      %p420 = scmp.lt.s32.totalorder %s419, 3
      %s421 = scalar_select %p420, %s419, 3
      %s422 = smul.addr %s421, 2
      %s423 = smul.addr %s422, 4
      %s424 = scalar_lea.vmem %s11, %s423
      %s425 = smul.u32 2, %s23
      %427 = vst [vmem:[#allocation2] sm:$0xff] 0.0
      %428 = vst [vmem:[#allocation2 + $0x8] sm:$0xff] 0.0
      %vm429 = vcmask 277504
      %430 = vst.msk [vmem:[#allocation2 + $0x10] sm:$0xff] %vm429, 0.0
      %431 = vst [vmem:[%s410] sm:$0xff] 0.0
      %432 = vst [vmem:[%s410 + $0x8] sm:$0xff] 0.0
      %433 = vst [vmem:[%s410 + $0x10] sm:$0xff] 0.0
      %434 = vst [vmem:[%s410 + $0x18] sm:$0xff] 0.0
      %v435 = vld [vmem:[%s0] sm:$0xff]
      %v436 = vld [vmem:[%s1] sm:$0xff]
      %v437 = vld [vmem:[%s1 + $0x8] sm:$0xff]
      %v438 = vld [vmem:[%s2] sm:$0x3]
      %v439 = vld [vmem:[%s3] sm:$0x3]
      %v440 = vld [vmem:[%s403] sm:$0x1]
      %v441 = vld [vmem:[%s403 + $0x10] sm:$0x1]
      %v442 = vld [vmem:[%s403 + $0x20] sm:$0x1]
      %v446 = vrot.slane %v441, 7
      %vm447 = vcmask 1041409
      %v448 = vsel %vm447, %v446, %v440
      %v449 = vrot.slane %v442, 6
      %vm450 = vcmask 1042434
      %v451 = vsel %vm450, %v449, %v448
      %vm453 = vcmask 108544
      %454 = vst.msk [vmem:[%s410] sm:$0x7] %vm453, %v451
      %v455 = vld [vmem:[%s403 + $0x1] sm:$0x1]
      %v456 = vld [vmem:[%s403 + $0x11] sm:$0x1]
      %v457 = vld [vmem:[%s403 + $0x21] sm:$0x1]
      %v461 = vrot.slane %v456, 7
      %v462 = vsel %vm447, %v461, %v455
      %v463 = vrot.slane %v457, 6
      %v464 = vsel %vm450, %v463, %v462
      %465 = vrot.lane.b32.xlu0 %v464, 16
      %v466 = vpop.permute.xlu0 %465
      %vm468 = vcmask 239744
      %469 = vst.msk [vmem:[%s410] sm:$0x7] %vm468, %v466
      %v470 = vld [vmem:[%s403 + $0x2] sm:$0x1]
      %v471 = vld [vmem:[%s403 + $0x12] sm:$0x1]
      %v472 = vld [vmem:[%s403 + $0x22] sm:$0x1]
      %v476 = vrot.slane %v471, 7
      %v477 = vsel %vm447, %v476, %v470
      %v478 = vrot.slane %v472, 6
      %v479 = vsel %vm450, %v478, %v477
      %480 = vrot.lane.b32.xlu0 %v479, 32
      %v481 = vpop.permute.xlu0 %480
      %vm483 = vcmask 370944
      %484 = vst.msk [vmem:[%s410] sm:$0x7] %vm483, %v481
      %v485 = vld [vmem:[%s403 + $0x3] sm:$0x1]
      %v486 = vld [vmem:[%s403 + $0x13] sm:$0x1]
      %v487 = vld [vmem:[%s403 + $0x23] sm:$0x1]
      %v491 = vrot.slane %v486, 7
      %v492 = vsel %vm447, %v491, %v485
      %v493 = vrot.slane %v487, 6
      %v494 = vsel %vm450, %v493, %v492
      %495 = vrot.lane.b32.xlu0 %v494, 48
      %v496 = vpop.permute.xlu0 %495
      %vm498 = vcmask 502144
      %499 = vst.msk [vmem:[%s410] sm:$0x7] %vm498, %v496
      %v500 = vld [vmem:[%s403 + $0x4] sm:$0x1]
      %v501 = vld [vmem:[%s403 + $0x14] sm:$0x1]
      %v502 = vld [vmem:[%s403 + $0x24] sm:$0x1]
      %v506 = vrot.slane %v501, 7
      %v507 = vsel %vm447, %v506, %v500
      %v508 = vrot.slane %v502, 6
      %v509 = vsel %vm450, %v508, %v507
      %510 = vrot.lane.b32.xlu0 %v509, 64
      %v511 = vpop.permute.xlu0 %510
      %vm513 = vcmask 633344
      %514 = vst.msk [vmem:[%s410] sm:$0x7] %vm513, %v511
      %v515 = vld [vmem:[%s403 + $0x5] sm:$0x1]
      %v516 = vld [vmem:[%s403 + $0x15] sm:$0x1]
      %v517 = vld [vmem:[%s403 + $0x25] sm:$0x1]
      %v521 = vrot.slane %v516, 7
      %v522 = vsel %vm447, %v521, %v515
      %v523 = vrot.slane %v517, 6
      %v524 = vsel %vm450, %v523, %v522
      %525 = vrot.lane.b32.xlu0 %v524, 80
      %v526 = vpop.permute.xlu0 %525
      %vm528 = vcmask 764544
      %529 = vst.msk [vmem:[%s410] sm:$0x7] %vm528, %v526
      %v530 = vld [vmem:[%s403 + $0x6] sm:$0x1]
      %v531 = vld [vmem:[%s403 + $0x16] sm:$0x1]
      %v532 = vld [vmem:[%s403 + $0x26] sm:$0x1]
      %v536 = vrot.slane %v531, 7
      %v537 = vsel %vm447, %v536, %v530
      %v538 = vrot.slane %v532, 6
      %v539 = vsel %vm450, %v538, %v537
      %540 = vrot.lane.b32.xlu0 %v539, 96
      %v541 = vpop.permute.xlu0 %540
      %vm543 = vcmask 895744
      %544 = vst.msk [vmem:[%s410] sm:$0x7] %vm543, %v541
      %v545 = vld [vmem:[%s403 + $0x7] sm:$0x1]
      %v546 = vld [vmem:[%s403 + $0x17] sm:$0x1]
      %v547 = vld [vmem:[%s403 + $0x27] sm:$0x1]
      %v551 = vrot.slane %v546, 7
      %v552 = vsel %vm447, %v551, %v545
      %v553 = vrot.slane %v547, 6
      %v554 = vsel %vm450, %v553, %v552
      %555 = vrot.lane.b32.xlu0 %v554, 112
      %v556 = vpop.permute.xlu0 %555
      %vm558 = vcmask 1026944
      %559 = vst.msk [vmem:[%s410] sm:$0x7] %vm558, %v556
      %v560 = vld [vmem:[%s403 + $0x8] sm:$0x1]
      %v561 = vld [vmem:[%s403 + $0x18] sm:$0x1]
      %v562 = vld [vmem:[%s403 + $0x28] sm:$0x1]
      %v566 = vrot.slane %v561, 7
      %v567 = vsel %vm447, %v566, %v560
      %v568 = vrot.slane %v562, 6
      %v569 = vsel %vm450, %v568, %v567
      %571 = vst.msk [vmem:[%s410 + $0x8] sm:$0x7] %vm453, %v569
      %v572 = vld [vmem:[%s403 + $0x9] sm:$0x1]
      %v573 = vld [vmem:[%s403 + $0x19] sm:$0x1]
      %v574 = vld [vmem:[%s403 + $0x29] sm:$0x1]
      %v578 = vrot.slane %v573, 7
      %v579 = vsel %vm447, %v578, %v572
      %v580 = vrot.slane %v574, 6
      %v581 = vsel %vm450, %v580, %v579
      %582 = vrot.lane.b32.xlu0 %v581, 16
      %v583 = vpop.permute.xlu0 %582
      %585 = vst.msk [vmem:[%s410 + $0x8] sm:$0x7] %vm468, %v583
      %v586 = vld [vmem:[%s403 + $0xa] sm:$0x1]
      %v587 = vld [vmem:[%s403 + $0x1a] sm:$0x1]
      %v588 = vld [vmem:[%s403 + $0x2a] sm:$0x1]
      %v592 = vrot.slane %v587, 7
      %v593 = vsel %vm447, %v592, %v586
      %v594 = vrot.slane %v588, 6
      %v595 = vsel %vm450, %v594, %v593
      %596 = vrot.lane.b32.xlu0 %v595, 32
      %v597 = vpop.permute.xlu0 %596
      %599 = vst.msk [vmem:[%s410 + $0x8] sm:$0x7] %vm483, %v597
      %v600 = vld [vmem:[%s403 + $0xb] sm:$0x1]
      %v601 = vld [vmem:[%s403 + $0x1b] sm:$0x1]
      %v602 = vld [vmem:[%s403 + $0x2b] sm:$0x1]
      %v606 = vrot.slane %v601, 7
      %v607 = vsel %vm447, %v606, %v600
      %v608 = vrot.slane %v602, 6
      %v609 = vsel %vm450, %v608, %v607
      %610 = vrot.lane.b32.xlu0 %v609, 48
      %v611 = vpop.permute.xlu0 %610
      %613 = vst.msk [vmem:[%s410 + $0x8] sm:$0x7] %vm498, %v611
      %v614 = vld [vmem:[%s403 + $0xc] sm:$0x1]
      %v615 = vld [vmem:[%s403 + $0x1c] sm:$0x1]
      %v616 = vld [vmem:[%s403 + $0x2c] sm:$0x1]
      %v620 = vrot.slane %v615, 7
      %v621 = vsel %vm447, %v620, %v614
      %v622 = vrot.slane %v616, 6
      %v623 = vsel %vm450, %v622, %v621
      %624 = vrot.lane.b32.xlu0 %v623, 64
      %v625 = vpop.permute.xlu0 %624
      %627 = vst.msk [vmem:[%s410 + $0x8] sm:$0x7] %vm513, %v625
      %v628 = vld [vmem:[%s403 + $0xd] sm:$0x1]
      %v629 = vld [vmem:[%s403 + $0x1d] sm:$0x1]
      %v630 = vld [vmem:[%s403 + $0x2d] sm:$0x1]
      %v634 = vrot.slane %v629, 7
      %v635 = vsel %vm447, %v634, %v628
      %v636 = vrot.slane %v630, 6
      %v637 = vsel %vm450, %v636, %v635
      %638 = vrot.lane.b32.xlu0 %v637, 80
      %v639 = vpop.permute.xlu0 %638
      %641 = vst.msk [vmem:[%s410 + $0x8] sm:$0x7] %vm528, %v639
      %v642 = vld [vmem:[%s410] sm:$0xff]
      %v643 = vld [vmem:[%s410 + $0x8] sm:$0xff]
      %645 = vset.pattern.permute.xlu0 0
      %646 = vperm.xlu0 %645, %v435
      %v647 = vpop.permute.xlu0 %646
      %v649 = vmul.f32 %v642, %v647
      %v650 = vmul.f32 %v643, %v647
      %v651 = vadd.f32 %v649, %v436
      %v652 = vadd.f32 %v650, %v437
      %653 = vst [vmem:[%s410] sm:$0xff] %v651
      %654 = vst [vmem:[%s410 + $0x8] sm:$0xff] %v652
      %657 = vrot.lane.b32.xlu0 %v651, 17
      %v658 = vpop.permute.xlu0 %657
      %659 = vrot.lane.b32.xlu0 %v652, 17
      %v660 = vpop.permute.xlu0 %659
      %vm661 = vcmask 138240
      %v662 = vsel %vm661, %v658, %v660
      %vm666 = vcmask 1047688
      %667 = vst.msk [vmem:[#allocation2] sm:$0xff] %vm666, %v658
      %668 = vst [vmem:[#allocation2 + $0x8] sm:$0xff] %v662
      %669 = vst.msk [vmem:[#allocation2 + $0x10] sm:$0xff] %vm661, %v660
      %v670 = vld [vmem:[#allocation2] sm:$0xff]
      %v671 = vld [vmem:[#allocation2 + $0x8] sm:$0xff]
      %v673 = vlaneseq
      %v674 = vshrl.u32 %v673, 7
      %v675 = vsub.s32 0, %v674
      %v676 = vrot.slane %v438, %v675
      %v677 = vlaneseq
      %v678 = vshrl.u32 %v677, 7
      %v679 = vsub.s32 1, %v678
      %v680 = vrot.slane %v438, %v679
      %v683 = vmul.f32 %v670, %v676
      %v684 = vmul.f32 %v671, %v680
      %685 = vst [vmem:[#allocation3] sm:$0xff] %v683
      %686 = vst [vmem:[#allocation3 + $0x8] sm:$0xff] %v684
      %v687 = vld [vmem:[#allocation2] sm:$0xff]
      %v688 = vld [vmem:[#allocation2 + $0x8] sm:$0xff]
      %v689 = vld [vmem:[#allocation2 + $0x10] sm:$0xff]
      %693 = vrot.lane.b32.xlu0 %v687, 127
      %v694 = vpop.permute.xlu0 %693
      %695 = vrot.lane.b32.xlu0 %v688, 127
      %v696 = vpop.permute.xlu0 %695
      %697 = vrot.lane.b32.xlu0 %v689, 127
      %v698 = vpop.permute.xlu0 %697
      %vm699 = vcmask 1039360
      %v700 = vsel %vm699, %v694, %v696
      %v701 = vsel %vm699, %v696, %v698
      %704 = vst [vmem:[#allocation3 + $0x20] sm:$0xff] %v700
      %705 = vst [vmem:[#allocation3 + $0x28] sm:$0xff] %v701
      %v706 = vld [vmem:[#allocation2] sm:$0xff]
      %v707 = vld [vmem:[#allocation2 + $0x8] sm:$0xff]
      %v708 = vld [vmem:[#allocation2 + $0x10] sm:$0xff]
      %v710 = vlaneseq
      %v711 = vshrl.u32 %v710, 7
      %v712 = vsub.s32 0, %v711
      %v713 = vrot.slane %v439, %v712
      %v714 = vlaneseq
      %v715 = vshrl.u32 %v714, 7
      %v716 = vsub.s32 1, %v715
      %v717 = vrot.slane %v439, %v716
      %718 = vrot.lane.b32.xlu0 %v713, 2
      %v719 = vpop.permute.xlu0 %718
      %720 = vrot.lane.b32.xlu0 %v717, 2
      %v721 = vpop.permute.xlu0 %720
      %vm722 = vcmask 15360
      %v723 = vsel %vm722, %v719, %v721
      %v727 = vmul.f32 %v706, %v719
      %v728 = vmul.f32 %v707, %v723
      %v729 = vmul.f32 %v708, %v721
      %733 = vrot.lane.b32.xlu0 %v727, 126
      %v734 = vpop.permute.xlu0 %733
      %735 = vrot.lane.b32.xlu0 %v728, 126
      %v736 = vpop.permute.xlu0 %735
      %737 = vrot.lane.b32.xlu0 %v729, 126
      %v738 = vpop.permute.xlu0 %737
      %vm739 = vcmask 1031168
      %v740 = vsel %vm739, %v734, %v736
      %v741 = vsel %vm739, %v736, %v738
      %744 = vst [vmem:[#allocation3 + $0x40] sm:$0xff] %v740
      %745 = vst [vmem:[#allocation3 + $0x48] sm:$0xff] %v741
      %v746 = vld [vmem:[#allocation2] sm:$0xff]
      %v747 = vld [vmem:[#allocation2 + $0x8] sm:$0xff]
      %v748 = vld [vmem:[#allocation2 + $0x10] sm:$0xff]
      %749 = vrot.lane.b32.xlu0 %v676, 16
      %v750 = vpop.permute.xlu0 %749
      %751 = vrot.lane.b32.xlu0 %v680, 16
      %v752 = vpop.permute.xlu0 %751
      %vm753 = vcmask 130048
      %v754 = vsel %vm753, %v750, %v752
      %v758 = vmul.f32 %v746, %v750
      %v759 = vmul.f32 %v747, %v754
      %v760 = vmul.f32 %v748, %v752
      %764 = vrot.lane.b32.xlu0 %v758, 112
      %v765 = vpop.permute.xlu0 %764
      %766 = vrot.lane.b32.xlu0 %v759, 112
      %v767 = vpop.permute.xlu0 %766
      %768 = vrot.lane.b32.xlu0 %v760, 112
      %v769 = vpop.permute.xlu0 %768
      %vm770 = vcmask 916480
      %v771 = vsel %vm770, %v765, %v767
      %v772 = vsel %vm770, %v767, %v769
      %775 = vst [vmem:[#allocation3 + $0x60] sm:$0xff] %v771
      %776 = vst [vmem:[#allocation3 + $0x68] sm:$0xff] %v772
      %v777 = vld [vmem:[#allocation2] sm:$0xff]
      %v778 = vld [vmem:[#allocation2 + $0x8] sm:$0xff]
      %v779 = vld [vmem:[#allocation2 + $0x10] sm:$0xff]
      %783 = vrot.lane.b32.xlu0 %v777, 111
      %v784 = vpop.permute.xlu0 %783
      %785 = vrot.lane.b32.xlu0 %v778, 111
      %v786 = vpop.permute.xlu0 %785
      %787 = vrot.lane.b32.xlu0 %v779, 111
      %v788 = vpop.permute.xlu0 %787
      %vm789 = vcmask 908288
      %v790 = vsel %vm789, %v784, %v786
      %v791 = vsel %vm789, %v786, %v788
      %794 = vst [vmem:[#allocation3 + $0x80] sm:$0xff] %v790
      %795 = vst [vmem:[#allocation3 + $0x88] sm:$0xff] %v791
      %v796 = vld [vmem:[#allocation2] sm:$0xff]
      %v797 = vld [vmem:[#allocation2 + $0x8] sm:$0xff]
      %v798 = vld [vmem:[#allocation2 + $0x10] sm:$0xff]
      %799 = vrot.lane.b32.xlu0 %v713, 18
      %v800 = vpop.permute.xlu0 %799
      %801 = vrot.lane.b32.xlu0 %v717, 18
      %v802 = vpop.permute.xlu0 %801
      %vm803 = vcmask 146432
      %v804 = vsel %vm803, %v800, %v802
      %v808 = vmul.f32 %v796, %v800
      %v809 = vmul.f32 %v797, %v804
      %v810 = vmul.f32 %v798, %v802
      %814 = vrot.lane.b32.xlu0 %v808, 110
      %v815 = vpop.permute.xlu0 %814
      %816 = vrot.lane.b32.xlu0 %v809, 110
      %v817 = vpop.permute.xlu0 %816
      %818 = vrot.lane.b32.xlu0 %v810, 110
      %v819 = vpop.permute.xlu0 %818
      %vm820 = vcmask 900096
      %v821 = vsel %vm820, %v815, %v817
      %v822 = vsel %vm820, %v817, %v819
      %825 = vst [vmem:[#allocation3 + $0xa0] sm:$0xff] %v821
      %826 = vst [vmem:[#allocation3 + $0xa8] sm:$0xff] %v822
      %v827 = vld [vmem:[#allocation2] sm:$0xff]
      %v828 = vld [vmem:[#allocation2 + $0x8] sm:$0xff]
      %v829 = vld [vmem:[#allocation2 + $0x10] sm:$0xff]
      %830 = vrot.lane.b32.xlu0 %v676, 32
      %v831 = vpop.permute.xlu0 %830
      %832 = vrot.lane.b32.xlu0 %v680, 32
      %v833 = vpop.permute.xlu0 %832
      %vm834 = vcmask 261120
      %v835 = vsel %vm834, %v831, %v833
      %v839 = vmul.f32 %v827, %v831
      %v840 = vmul.f32 %v828, %v835
      %v841 = vmul.f32 %v829, %v833
      %845 = vrot.lane.b32.xlu0 %v839, 96
      %v846 = vpop.permute.xlu0 %845
      %847 = vrot.lane.b32.xlu0 %v840, 96
      %v848 = vpop.permute.xlu0 %847
      %849 = vrot.lane.b32.xlu0 %v841, 96
      %v850 = vpop.permute.xlu0 %849
      %vm851 = vcmask 785408
      %v852 = vsel %vm851, %v846, %v848
      %v853 = vsel %vm851, %v848, %v850
      %856 = vst [vmem:[#allocation3 + $0xc0] sm:$0xff] %v852
      %857 = vst [vmem:[#allocation3 + $0xc8] sm:$0xff] %v853
      %v858 = vld [vmem:[#allocation2] sm:$0xff]
      %v859 = vld [vmem:[#allocation2 + $0x8] sm:$0xff]
      %v860 = vld [vmem:[#allocation2 + $0x10] sm:$0xff]
      %864 = vrot.lane.b32.xlu0 %v858, 95
      %v865 = vpop.permute.xlu0 %864
      %866 = vrot.lane.b32.xlu0 %v859, 95
      %v867 = vpop.permute.xlu0 %866
      %868 = vrot.lane.b32.xlu0 %v860, 95
      %v869 = vpop.permute.xlu0 %868
      %vm870 = vcmask 777216
      %v871 = vsel %vm870, %v865, %v867
      %v872 = vsel %vm870, %v867, %v869
      %875 = vst [vmem:[#allocation3 + $0xe0] sm:$0xff] %v871
      %876 = vst [vmem:[#allocation3 + $0xe8] sm:$0xff] %v872
      %v877 = vld [vmem:[#allocation2] sm:$0xff]
      %v878 = vld [vmem:[#allocation2 + $0x8] sm:$0xff]
      %v879 = vld [vmem:[#allocation2 + $0x10] sm:$0xff]
      %880 = vrot.lane.b32.xlu0 %v713, 34
      %v881 = vpop.permute.xlu0 %880
      %882 = vrot.lane.b32.xlu0 %v717, 34
      %v883 = vpop.permute.xlu0 %882
      %v884 = vsel %vm429, %v881, %v883
      %v888 = vmul.f32 %v877, %v881
      %v889 = vmul.f32 %v878, %v884
      %v890 = vmul.f32 %v879, %v883
      %894 = vrot.lane.b32.xlu0 %v888, 94
      %v895 = vpop.permute.xlu0 %894
      %896 = vrot.lane.b32.xlu0 %v889, 94
      %v897 = vpop.permute.xlu0 %896
      %898 = vrot.lane.b32.xlu0 %v890, 94
      %v899 = vpop.permute.xlu0 %898
      %vm900 = vcmask 769024
      %v901 = vsel %vm900, %v895, %v897
      %v902 = vsel %vm900, %v897, %v899
      %905 = vst [vmem:[#allocation3 + $0x100] sm:$0xff] %v901
      %906 = vst [vmem:[#allocation3 + $0x108] sm:$0xff] %v902
      %s907 = scalar_lea.vmem %s403, 48
      %v908 = vld [vmem:[%s907] sm:$0x1]
      %v909 = vld [vmem:[%s907 + $0x10] sm:$0x1]
      %v910 = vld [vmem:[%s907 + $0x20] sm:$0x1]
      %v914 = vrot.slane %v909, 7
      %v915 = vsel %vm447, %v914, %v908
      %v916 = vrot.slane %v910, 6
      %v917 = vsel %vm450, %v916, %v915
      %s919 = scalar_lea.vmem %s410, 16
      %920 = vst.msk [vmem:[%s919] sm:$0x7] %vm453, %v917
      %v921 = vld [vmem:[%s907 + $0x1] sm:$0x1]
      %v922 = vld [vmem:[%s907 + $0x11] sm:$0x1]
      %v923 = vld [vmem:[%s907 + $0x21] sm:$0x1]
      %v927 = vrot.slane %v922, 7
      %v928 = vsel %vm447, %v927, %v921
      %v929 = vrot.slane %v923, 6
      %v930 = vsel %vm450, %v929, %v928
      %931 = vrot.lane.b32.xlu0 %v930, 16
      %v932 = vpop.permute.xlu0 %931
      %934 = vst.msk [vmem:[%s919] sm:$0x7] %vm468, %v932
      %v935 = vld [vmem:[%s907 + $0x2] sm:$0x1]
      %v936 = vld [vmem:[%s907 + $0x12] sm:$0x1]
      %v937 = vld [vmem:[%s907 + $0x22] sm:$0x1]
      %v941 = vrot.slane %v936, 7
      %v942 = vsel %vm447, %v941, %v935
      %v943 = vrot.slane %v937, 6
      %v944 = vsel %vm450, %v943, %v942
      %945 = vrot.lane.b32.xlu0 %v944, 32
      %v946 = vpop.permute.xlu0 %945
      %948 = vst.msk [vmem:[%s919] sm:$0x7] %vm483, %v946
      %v949 = vld [vmem:[%s907 + $0x3] sm:$0x1]
      %v950 = vld [vmem:[%s907 + $0x13] sm:$0x1]
      %v951 = vld [vmem:[%s907 + $0x23] sm:$0x1]
      %v955 = vrot.slane %v950, 7
      %v956 = vsel %vm447, %v955, %v949
      %v957 = vrot.slane %v951, 6
      %v958 = vsel %vm450, %v957, %v956
      %959 = vrot.lane.b32.xlu0 %v958, 48
      %v960 = vpop.permute.xlu0 %959
      %962 = vst.msk [vmem:[%s919] sm:$0x7] %vm498, %v960
      %v963 = vld [vmem:[%s907 + $0x4] sm:$0x1]
      %v964 = vld [vmem:[%s907 + $0x14] sm:$0x1]
      %v965 = vld [vmem:[%s907 + $0x24] sm:$0x1]
      %v969 = vrot.slane %v964, 7
      %v970 = vsel %vm447, %v969, %v963
      %v971 = vrot.slane %v965, 6
      %v972 = vsel %vm450, %v971, %v970
      %973 = vrot.lane.b32.xlu0 %v972, 64
      %v974 = vpop.permute.xlu0 %973
      %976 = vst.msk [vmem:[%s919] sm:$0x7] %vm513, %v974
      %v977 = vld [vmem:[%s907 + $0x5] sm:$0x1]
      %v978 = vld [vmem:[%s907 + $0x15] sm:$0x1]
      %v979 = vld [vmem:[%s907 + $0x25] sm:$0x1]
      %v983 = vrot.slane %v978, 7
      %v984 = vsel %vm447, %v983, %v977
      %v985 = vrot.slane %v979, 6
      %v986 = vsel %vm450, %v985, %v984
      %987 = vrot.lane.b32.xlu0 %v986, 80
      %v988 = vpop.permute.xlu0 %987
      %990 = vst.msk [vmem:[%s919] sm:$0x7] %vm528, %v988
      %v991 = vld [vmem:[%s907 + $0x6] sm:$0x1]
      %v992 = vld [vmem:[%s907 + $0x16] sm:$0x1]
      %v993 = vld [vmem:[%s907 + $0x26] sm:$0x1]
      %v997 = vrot.slane %v992, 7
      %v998 = vsel %vm447, %v997, %v991
      %v999 = vrot.slane %v993, 6
      %v1000 = vsel %vm450, %v999, %v998
      %1001 = vrot.lane.b32.xlu0 %v1000, 96
      %v1002 = vpop.permute.xlu0 %1001
      %1004 = vst.msk [vmem:[%s919] sm:$0x7] %vm543, %v1002
      %v1005 = vld [vmem:[%s907 + $0x7] sm:$0x1]
      %v1006 = vld [vmem:[%s907 + $0x17] sm:$0x1]
      %v1007 = vld [vmem:[%s907 + $0x27] sm:$0x1]
      %v1011 = vrot.slane %v1006, 7
      %v1012 = vsel %vm447, %v1011, %v1005
      %v1013 = vrot.slane %v1007, 6
      %v1014 = vsel %vm450, %v1013, %v1012
      %1015 = vrot.lane.b32.xlu0 %v1014, 112
      %v1016 = vpop.permute.xlu0 %1015
      %1018 = vst.msk [vmem:[%s919] sm:$0x7] %vm558, %v1016
      %v1019 = vld [vmem:[%s907 + $0x8] sm:$0x1]
      %v1020 = vld [vmem:[%s907 + $0x18] sm:$0x1]
      %v1021 = vld [vmem:[%s907 + $0x28] sm:$0x1]
      %v1025 = vrot.slane %v1020, 7
      %v1026 = vsel %vm447, %v1025, %v1019
      %v1027 = vrot.slane %v1021, 6
      %v1028 = vsel %vm450, %v1027, %v1026
      %1030 = vst.msk [vmem:[%s919 + $0x8] sm:$0x7] %vm453, %v1028
      %v1031 = vld [vmem:[%s907 + $0x9] sm:$0x1]
      %v1032 = vld [vmem:[%s907 + $0x19] sm:$0x1]
      %v1033 = vld [vmem:[%s907 + $0x29] sm:$0x1]
      %v1037 = vrot.slane %v1032, 7
      %v1038 = vsel %vm447, %v1037, %v1031
      %v1039 = vrot.slane %v1033, 6
      %v1040 = vsel %vm450, %v1039, %v1038
      %1041 = vrot.lane.b32.xlu0 %v1040, 16
      %v1042 = vpop.permute.xlu0 %1041
      %1044 = vst.msk [vmem:[%s919 + $0x8] sm:$0x7] %vm468, %v1042
      %v1045 = vld [vmem:[%s907 + $0xa] sm:$0x1]
      %v1046 = vld [vmem:[%s907 + $0x1a] sm:$0x1]
      %v1047 = vld [vmem:[%s907 + $0x2a] sm:$0x1]
      %v1051 = vrot.slane %v1046, 7
      %v1052 = vsel %vm447, %v1051, %v1045
      %v1053 = vrot.slane %v1047, 6
      %v1054 = vsel %vm450, %v1053, %v1052
      %1055 = vrot.lane.b32.xlu0 %v1054, 32
      %v1056 = vpop.permute.xlu0 %1055
      %1058 = vst.msk [vmem:[%s919 + $0x8] sm:$0x7] %vm483, %v1056
      %v1059 = vld [vmem:[%s907 + $0xb] sm:$0x1]
      %v1060 = vld [vmem:[%s907 + $0x1b] sm:$0x1]
      %v1061 = vld [vmem:[%s907 + $0x2b] sm:$0x1]
      %v1065 = vrot.slane %v1060, 7
      %v1066 = vsel %vm447, %v1065, %v1059
      %v1067 = vrot.slane %v1061, 6
      %v1068 = vsel %vm450, %v1067, %v1066
      %1069 = vrot.lane.b32.xlu0 %v1068, 48
      %v1070 = vpop.permute.xlu0 %1069
      %1072 = vst.msk [vmem:[%s919 + $0x8] sm:$0x7] %vm498, %v1070
      %v1073 = vld [vmem:[%s907 + $0xc] sm:$0x1]
      %v1074 = vld [vmem:[%s907 + $0x1c] sm:$0x1]
      %v1075 = vld [vmem:[%s907 + $0x2c] sm:$0x1]
      %v1079 = vrot.slane %v1074, 7
      %v1080 = vsel %vm447, %v1079, %v1073
      %v1081 = vrot.slane %v1075, 6
      %v1082 = vsel %vm450, %v1081, %v1080
      %1083 = vrot.lane.b32.xlu0 %v1082, 64
      %v1084 = vpop.permute.xlu0 %1083
      %1086 = vst.msk [vmem:[%s919 + $0x8] sm:$0x7] %vm513, %v1084
      %v1087 = vld [vmem:[%s907 + $0xd] sm:$0x1]
      %v1088 = vld [vmem:[%s907 + $0x1d] sm:$0x1]
      %v1089 = vld [vmem:[%s907 + $0x2d] sm:$0x1]
      %v1093 = vrot.slane %v1088, 7
      %v1094 = vsel %vm447, %v1093, %v1087
      %v1095 = vrot.slane %v1089, 6
      %v1096 = vsel %vm450, %v1095, %v1094
      %1097 = vrot.lane.b32.xlu0 %v1096, 80
      %v1098 = vpop.permute.xlu0 %1097
      %1100 = vst.msk [vmem:[%s919 + $0x8] sm:$0x7] %vm528, %v1098
      %v1101 = vld [vmem:[%s919] sm:$0xff]
      %v1102 = vld [vmem:[%s919 + $0x8] sm:$0xff]
      %v1103 = vmul.f32 %v1101, %v647
      %v1104 = vmul.f32 %v1102, %v647
      %v1105 = vadd.f32 %v1103, %v436
      %v1106 = vadd.f32 %v1104, %v437
      %1107 = vst [vmem:[%s919] sm:$0xff] %v1105
      %1108 = vst [vmem:[%s919 + $0x8] sm:$0xff] %v1106
      %1111 = vrot.lane.b32.xlu0 %v1105, 17
      %v1112 = vpop.permute.xlu0 %1111
      %1113 = vrot.lane.b32.xlu0 %v1106, 17
      %v1114 = vpop.permute.xlu0 %1113
      %v1115 = vsel %vm661, %v1112, %v1114
      %1119 = vst.msk [vmem:[#allocation2] sm:$0xff] %vm666, %v1112
      %1120 = vst [vmem:[#allocation2 + $0x8] sm:$0xff] %v1115
      %1121 = vst.msk [vmem:[#allocation2 + $0x10] sm:$0xff] %vm661, %v1114
      %v1122 = vld [vmem:[#allocation2] sm:$0xff]
      %v1123 = vld [vmem:[#allocation2 + $0x8] sm:$0xff]
      %v1124 = vmul.f32 %v1122, %v676
      %v1125 = vmul.f32 %v1123, %v680
      %1126 = vst [vmem:[#allocation3 + $0x10] sm:$0xff] %v1124
      %1127 = vst [vmem:[#allocation3 + $0x18] sm:$0xff] %v1125
      %v1128 = vld [vmem:[#allocation2] sm:$0xff]
      %v1129 = vld [vmem:[#allocation2 + $0x8] sm:$0xff]
      %v1130 = vld [vmem:[#allocation2 + $0x10] sm:$0xff]
      %1134 = vrot.lane.b32.xlu0 %v1128, 127
      %v1135 = vpop.permute.xlu0 %1134
      %1136 = vrot.lane.b32.xlu0 %v1129, 127
      %v1137 = vpop.permute.xlu0 %1136
      %1138 = vrot.lane.b32.xlu0 %v1130, 127
      %v1139 = vpop.permute.xlu0 %1138
      %v1140 = vsel %vm699, %v1135, %v1137
      %v1141 = vsel %vm699, %v1137, %v1139
      %1144 = vst [vmem:[#allocation3 + $0x30] sm:$0xff] %v1140
      %1145 = vst [vmem:[#allocation3 + $0x38] sm:$0xff] %v1141
      %v1146 = vld [vmem:[#allocation2] sm:$0xff]
      %v1147 = vld [vmem:[#allocation2 + $0x8] sm:$0xff]
      %v1148 = vld [vmem:[#allocation2 + $0x10] sm:$0xff]
      %v1149 = vmul.f32 %v1146, %v719
      %v1150 = vmul.f32 %v1147, %v723
      %v1151 = vmul.f32 %v1148, %v721
      %1155 = vrot.lane.b32.xlu0 %v1149, 126
      %v1156 = vpop.permute.xlu0 %1155
      %1157 = vrot.lane.b32.xlu0 %v1150, 126
      %v1158 = vpop.permute.xlu0 %1157
      %1159 = vrot.lane.b32.xlu0 %v1151, 126
      %v1160 = vpop.permute.xlu0 %1159
      %v1161 = vsel %vm739, %v1156, %v1158
      %v1162 = vsel %vm739, %v1158, %v1160
      %1165 = vst [vmem:[#allocation3 + $0x50] sm:$0xff] %v1161
      %1166 = vst [vmem:[#allocation3 + $0x58] sm:$0xff] %v1162
      %v1167 = vld [vmem:[#allocation2] sm:$0xff]
      %v1168 = vld [vmem:[#allocation2 + $0x8] sm:$0xff]
      %v1169 = vld [vmem:[#allocation2 + $0x10] sm:$0xff]
      %v1170 = vmul.f32 %v1167, %v750
      %v1171 = vmul.f32 %v1168, %v754
      %v1172 = vmul.f32 %v1169, %v752
      %1176 = vrot.lane.b32.xlu0 %v1170, 112
      %v1177 = vpop.permute.xlu0 %1176
      %1178 = vrot.lane.b32.xlu0 %v1171, 112
      %v1179 = vpop.permute.xlu0 %1178
      %1180 = vrot.lane.b32.xlu0 %v1172, 112
      %v1181 = vpop.permute.xlu0 %1180
      %v1182 = vsel %vm770, %v1177, %v1179
      %v1183 = vsel %vm770, %v1179, %v1181
      %1186 = vst [vmem:[#allocation3 + $0x70] sm:$0xff] %v1182
      %1187 = vst [vmem:[#allocation3 + $0x78] sm:$0xff] %v1183
      %v1188 = vld [vmem:[#allocation2] sm:$0xff]
      %v1189 = vld [vmem:[#allocation2 + $0x8] sm:$0xff]
      %v1190 = vld [vmem:[#allocation2 + $0x10] sm:$0xff]
      %1194 = vrot.lane.b32.xlu0 %v1188, 111
      %v1195 = vpop.permute.xlu0 %1194
      %1196 = vrot.lane.b32.xlu0 %v1189, 111
      %v1197 = vpop.permute.xlu0 %1196
      %1198 = vrot.lane.b32.xlu0 %v1190, 111
      %v1199 = vpop.permute.xlu0 %1198
      %v1200 = vsel %vm789, %v1195, %v1197
      %v1201 = vsel %vm789, %v1197, %v1199
      %1204 = vst [vmem:[#allocation3 + $0x90] sm:$0xff] %v1200
      %1205 = vst [vmem:[#allocation3 + $0x98] sm:$0xff] %v1201
      %v1206 = vld [vmem:[#allocation2] sm:$0xff]
      %v1207 = vld [vmem:[#allocation2 + $0x8] sm:$0xff]
      %v1208 = vld [vmem:[#allocation2 + $0x10] sm:$0xff]
      %v1209 = vmul.f32 %v1206, %v800
      %v1210 = vmul.f32 %v1207, %v804
      %v1211 = vmul.f32 %v1208, %v802
      %1215 = vrot.lane.b32.xlu0 %v1209, 110
      %v1216 = vpop.permute.xlu0 %1215
      %1217 = vrot.lane.b32.xlu0 %v1210, 110
      %v1218 = vpop.permute.xlu0 %1217
      %1219 = vrot.lane.b32.xlu0 %v1211, 110
      %v1220 = vpop.permute.xlu0 %1219
      %v1221 = vsel %vm820, %v1216, %v1218
      %v1222 = vsel %vm820, %v1218, %v1220
      %1225 = vst [vmem:[#allocation3 + $0xb0] sm:$0xff] %v1221
      %1226 = vst [vmem:[#allocation3 + $0xb8] sm:$0xff] %v1222
      %v1227 = vld [vmem:[#allocation2] sm:$0xff]
      %v1228 = vld [vmem:[#allocation2 + $0x8] sm:$0xff]
      %v1229 = vld [vmem:[#allocation2 + $0x10] sm:$0xff]
      %v1230 = vmul.f32 %v1227, %v831
      %v1231 = vmul.f32 %v1228, %v835
      %v1232 = vmul.f32 %v1229, %v833
      %1236 = vrot.lane.b32.xlu0 %v1230, 96
      %v1237 = vpop.permute.xlu0 %1236
      %1238 = vrot.lane.b32.xlu0 %v1231, 96
      %v1239 = vpop.permute.xlu0 %1238
      %1240 = vrot.lane.b32.xlu0 %v1232, 96
      %v1241 = vpop.permute.xlu0 %1240
      %v1242 = vsel %vm851, %v1237, %v1239
      %v1243 = vsel %vm851, %v1239, %v1241
      %1246 = vst [vmem:[#allocation3 + $0xd0] sm:$0xff] %v1242
      %1247 = vst [vmem:[#allocation3 + $0xd8] sm:$0xff] %v1243
      %v1248 = vld [vmem:[#allocation2] sm:$0xff]
      %v1249 = vld [vmem:[#allocation2 + $0x8] sm:$0xff]
      %v1250 = vld [vmem:[#allocation2 + $0x10] sm:$0xff]
      %1254 = vrot.lane.b32.xlu0 %v1248, 95
      %v1255 = vpop.permute.xlu0 %1254
      %1256 = vrot.lane.b32.xlu0 %v1249, 95
      %v1257 = vpop.permute.xlu0 %1256
      %1258 = vrot.lane.b32.xlu0 %v1250, 95
      %v1259 = vpop.permute.xlu0 %1258
      %v1260 = vsel %vm870, %v1255, %v1257
      %v1261 = vsel %vm870, %v1257, %v1259
      %1264 = vst [vmem:[#allocation3 + $0xf0] sm:$0xff] %v1260
      %1265 = vst [vmem:[#allocation3 + $0xf8] sm:$0xff] %v1261
      %v1266 = vld [vmem:[#allocation2] sm:$0xff]
      %v1267 = vld [vmem:[#allocation2 + $0x8] sm:$0xff]
      %v1268 = vld [vmem:[#allocation2 + $0x10] sm:$0xff]
      %v1269 = vmul.f32 %v1266, %v881
      %v1270 = vmul.f32 %v1267, %v884
      %v1271 = vmul.f32 %v1268, %v883
      %1275 = vrot.lane.b32.xlu0 %v1269, 94
      %v1276 = vpop.permute.xlu0 %1275
      %1277 = vrot.lane.b32.xlu0 %v1270, 94
      %v1278 = vpop.permute.xlu0 %1277
      %1279 = vrot.lane.b32.xlu0 %v1271, 94
      %v1280 = vpop.permute.xlu0 %1279
      %v1281 = vsel %vm900, %v1276, %v1278
      %v1282 = vsel %vm900, %v1278, %v1280
      %1285 = vst [vmem:[#allocation3 + $0x110] sm:$0xff] %v1281
      %1286 = vst [vmem:[#allocation3 + $0x118] sm:$0xff] %v1282
      %v1287 = vld [vmem:[#allocation3] sm:$0xff]
      %v1288 = vld [vmem:[#allocation3 + $0x8] sm:$0xff]
      %v1289 = vld [vmem:[#allocation3 + $0x10] sm:$0xff]
      %v1290 = vld [vmem:[#allocation3 + $0x18] sm:$0xff]
      %v1291 = vld [vmem:[#allocation3 + $0x20] sm:$0xff]
      %v1292 = vld [vmem:[#allocation3 + $0x28] sm:$0xff]
      %v1293 = vld [vmem:[#allocation3 + $0x30] sm:$0xff]
      %v1294 = vld [vmem:[#allocation3 + $0x38] sm:$0xff]
      %v1295 = vld [vmem:[#allocation3 + $0x40] sm:$0xff]
      %v1296 = vld [vmem:[#allocation3 + $0x48] sm:$0xff]
      %v1297 = vld [vmem:[#allocation3 + $0x50] sm:$0xff]
      %v1298 = vld [vmem:[#allocation3 + $0x58] sm:$0xff]
      %v1299 = vld [vmem:[#allocation3 + $0x60] sm:$0xff]
      %v1300 = vld [vmem:[#allocation3 + $0x68] sm:$0xff]
      %v1301 = vld [vmem:[#allocation3 + $0x70] sm:$0xff]
      %v1302 = vld [vmem:[#allocation3 + $0x78] sm:$0xff]
      %v1303 = vld [vmem:[#allocation3 + $0x80] sm:$0xff]
      %v1304 = vld [vmem:[#allocation3 + $0x88] sm:$0xff]
      %v1305 = vld [vmem:[#allocation3 + $0x90] sm:$0xff]
      %v1306 = vld [vmem:[#allocation3 + $0x98] sm:$0xff]
      %v1307 = vld [vmem:[#allocation3 + $0xa0] sm:$0xff]
      %v1308 = vld [vmem:[#allocation3 + $0xa8] sm:$0xff]
      %v1309 = vld [vmem:[#allocation3 + $0xb0] sm:$0xff]
      %v1310 = vld [vmem:[#allocation3 + $0xb8] sm:$0xff]
      %v1311 = vld [vmem:[#allocation3 + $0xc0] sm:$0xff]
      %v1312 = vld [vmem:[#allocation3 + $0xc8] sm:$0xff]
      %v1313 = vld [vmem:[#allocation3 + $0xd0] sm:$0xff]
      %v1314 = vld [vmem:[#allocation3 + $0xd8] sm:$0xff]
      %v1315 = vld [vmem:[#allocation3 + $0xe0] sm:$0xff]
      %v1316 = vld [vmem:[#allocation3 + $0xe8] sm:$0xff]
      %v1317 = vld [vmem:[#allocation3 + $0xf0] sm:$0xff]
      %v1318 = vld [vmem:[#allocation3 + $0xf8] sm:$0xff]
      %v1319 = vld [vmem:[#allocation3 + $0x100] sm:$0xff]
      %v1320 = vld [vmem:[#allocation3 + $0x108] sm:$0xff]
      %v1321 = vld [vmem:[#allocation3 + $0x110] sm:$0xff]
      %v1322 = vld [vmem:[#allocation3 + $0x118] sm:$0xff]
      %v1323 = vpack.c.bf16 %v1291, %v1287
      %v1324 = vpack.c.bf16 %v1292, %v1288
      %v1325 = vpack.c.bf16 %v1293, %v1289
      %v1326 = vpack.c.bf16 %v1294, %v1290
      %v1327 = vpack.c.bf16 %v1299, %v1295
      %v1328 = vpack.c.bf16 %v1300, %v1296
      %v1329 = vpack.c.bf16 %v1301, %v1297
      %v1330 = vpack.c.bf16 %v1302, %v1298
      %v1331 = vpack.c.bf16 %v1307, %v1303
      %v1332 = vpack.c.bf16 %v1308, %v1304
      %v1333 = vpack.c.bf16 %v1309, %v1305
      %v1334 = vpack.c.bf16 %v1310, %v1306
      %v1335 = vpack.c.bf16 %v1315, %v1311
      %v1336 = vpack.c.bf16 %v1316, %v1312
      %v1337 = vpack.c.bf16 %v1317, %v1313
      %v1338 = vpack.c.bf16 %v1318, %v1314
      %v1339 = vpack.c.bf16 %v1319, %v1319
      %v1340 = vpack.c.bf16 %v1320, %v1320
      %v1341 = vpack.c.bf16 %v1321, %v1321
      %v1342 = vpack.c.bf16 %v1322, %v1322
      %v1343 = vld [vmem:[%s5] sm:$0xf]
      %v1344 = vld [vmem:[%s5 + $0x4] sm:$0xf]
      %v1345 = vld [vmem:[%s5 + $0x8] sm:$0xf]
      %v1346 = vld [vmem:[%s5 + $0xc] sm:$0xf]
      %v1347 = vld [vmem:[%s6] sm:$0xff]
      %v1348 = vld [vmem:[%s6 + $0x8] sm:$0xff]
      %v1349 = vld [vmem:[%s6 + $0x10] sm:$0xff]
      %v1350 = vld [vmem:[%s6 + $0x18] sm:$0xff]
      %1352 = vset.pattern.permute.xlu0 0
      %1353 = vperm.xlu0 %1352, %v1347
      %v1354 = vpop.permute.xlu0 %1353
      %1357 = vset.pattern.permute.xlu0 0
      %1358 = vperm.xlu0 %1357, %v1348
      %v1359 = vpop.permute.xlu0 %1358
      %1362 = vset.pattern.permute.xlu0 0
      %1363 = vperm.xlu0 %1362, %v1349
      %v1364 = vpop.permute.xlu0 %1363
      %1367 = vset.pattern.permute.xlu0 0
      %1368 = vperm.xlu0 %1367, %v1350
      %v1369 = vpop.permute.xlu0 %1368
      %v1375 = vunpack.c.l.b16 %v1343
      %v1376 = vunpack.c.l.b16 %v1344
      %v1377 = vunpack.c.l.b16 %v1345
      %v1378 = vunpack.c.l.b16 %v1346
      %v1379 = vpack.c.b16 %v1376, %v1375
      %v1380 = vpack.c.b16 %v1378, %v1377
      %vm1381 = vcmask 588800
      %v1383 = vsel %vm1381, %v1379, 0
      %v1386 = vsel %vm1381, %v1380, 0
      %vm1388 = vcmask 1043456
      %v1390 = vsel %vm1388, %v1339, 0
      %v1393 = vsel %vm1388, %v1340, 0
      %v1396 = vsel %vm1388, %v1341, 0
      %v1399 = vsel %vm1388, %v1342, 0
      %1401 = vmatprep.subr.bf16.mxu0 %v1324
      %1402 = vmatpush1.bf16.msra.mxu0 %v1323
      %1403 = vmatprep.subr.bf16.mxu0 %v1328
      %1404 = vmatpush1.bf16.msra.mxu0 %v1327
      %1405 = vmatprep.subr.bf16.mxu0 %v1332
      %1406 = vmatpush1.bf16.msra.mxu0 %v1331
      %1407 = vmatprep.subr.bf16.mxu0 %v1336
      %1408 = vmatpush1.bf16.msra.mxu0 %v1335
      %1409 = vmatprep.subr.bf16.mxu0 %v1393
      %1410 = vmatpush1.bf16.msra.mxu0 %v1390
      %1411 = vmatprep.subr.bf16.mxu0 0
      %1412 = vmatpush1.bf16.msra.mxu0 0
      %1413 = vmatprep.subr.bf16.mxu0 0
      %1414 = vmatpush1.bf16.msra.mxu0 0
      %1415 = vmatprep.subr.bf16.mxu0 0
      %1416 = vmatpush1.bf16.msra.mxu0 0
      %1417 = vmatprep.subr.bf16.mxu0 0
      %1418 = vmatpush1.bf16.msra.mxu0 0
      %1419 = vmatprep.subr.bf16.mxu0 0
      %1420 = vmatpush1.bf16.msra.mxu0 0
      %1421 = vmatprep.subr.bf16.mxu0 0
      %1422 = vmatpush1.bf16.msra.mxu0 0
      %1423 = vmatprep.subr.bf16.mxu0 0
      %1424 = vmatpush1.bf16.msra.mxu0 0
      %1425 = vmatprep.subr.bf16.mxu0 0
      %1426 = vmatpush1.bf16.msra.mxu0 0
      %1427 = vmatprep.subr.bf16.mxu0 0
      %1428 = vmatpush1.bf16.msra.mxu0 0
      %1429 = vmatprep.subr.bf16.mxu0 0
      %1430 = vmatpush1.bf16.msra.mxu0 0
      %1431 = vmatprep.subr.bf16.mxu0 0
      %1432 = vmatpush1.bf16.msra.mxu0 0
      %1433 = vmatprep.mubr.bf16.mxu0 0
      %1434 = vmatmul.mubr.bf16.gmra.mrb[0].mxu0 %v1383
      %v1435 = vpop.f32.mrb[0].mxu0
      %v1436 = vadd.f32 %v1354, %v1435
      %v1437 = vpop.f32.mrb[0].mxu0
      %v1438 = vadd.f32 %v1354, %v1437
      %v1439 = vpop.f32.mrb[0].mxu0
      %v1440 = vadd.f32 %v1359, %v1439
      %v1441 = vpop.f32.mrb[0].mxu0
      %v1442 = vadd.f32 %v1359, %v1441
      %1443 = vmatprep.mubr.bf16.mxu0 0
      %1444 = vmatmul.mubr.bf16.gmra.mrb[0].mxu0 %v1386
      %v1445 = vpop.f32.mrb[0].mxu0
      %v1446 = vadd.f32 %v1364, %v1445
      %v1447 = vpop.f32.mrb[0].mxu0
      %v1448 = vadd.f32 %v1364, %v1447
      %v1449 = vpop.f32.mrb[0].mxu0
      %v1450 = vadd.f32 %v1369, %v1449
      %v1451 = vpop.f32.mrb[0].mxu0
      %v1452 = vadd.f32 %v1369, %v1451
      %1453 = vdwg.mxu0
      %1454 = vmatprep.subr.bf16.mxu0 %v1326
      %1455 = vmatpush1.bf16.msra.mxu0 %v1325
      %1456 = vmatprep.subr.bf16.mxu0 %v1330
      %1457 = vmatpush1.bf16.msra.mxu0 %v1329
      %1458 = vmatprep.subr.bf16.mxu0 %v1334
      %1459 = vmatpush1.bf16.msra.mxu0 %v1333
      %1460 = vmatprep.subr.bf16.mxu0 %v1338
      %1461 = vmatpush1.bf16.msra.mxu0 %v1337
      %1462 = vmatprep.subr.bf16.mxu0 %v1399
      %1463 = vmatpush1.bf16.msra.mxu0 %v1396
      %1464 = vmatprep.subr.bf16.mxu0 0
      %1465 = vmatpush1.bf16.msra.mxu0 0
      %1466 = vmatprep.subr.bf16.mxu0 0
      %1467 = vmatpush1.bf16.msra.mxu0 0
      %1468 = vmatprep.subr.bf16.mxu0 0
      %1469 = vmatpush1.bf16.msra.mxu0 0
      %1470 = vmatprep.subr.bf16.mxu0 0
      %1471 = vmatpush1.bf16.msra.mxu0 0
      %1472 = vmatprep.subr.bf16.mxu0 0
      %1473 = vmatpush1.bf16.msra.mxu0 0
      %1474 = vmatprep.subr.bf16.mxu0 0
      %1475 = vmatpush1.bf16.msra.mxu0 0
      %1476 = vmatprep.subr.bf16.mxu0 0
      %1477 = vmatpush1.bf16.msra.mxu0 0
      %1478 = vmatprep.subr.bf16.mxu0 0
      %1479 = vmatpush1.bf16.msra.mxu0 0
      %1480 = vmatprep.subr.bf16.mxu0 0
      %1481 = vmatpush1.bf16.msra.mxu0 0
      %1482 = vmatprep.subr.bf16.mxu0 0
      %1483 = vmatpush1.bf16.msra.mxu0 0
      %1484 = vmatprep.subr.bf16.mxu0 0
      %1485 = vmatpush1.bf16.msra.mxu0 0
      %1486 = vmatprep.mubr.bf16.mxu0 0
      %1487 = vmatmul.mubr.bf16.gmra.mrb[0].mxu0 %v1383
      %v1488 = vpop.f32.mrb[0].mxu0
      %v1489 = vadd.f32 %v1354, %v1488
      %v1490 = vpop.f32.mrb[0].mxu0
      %v1491 = vadd.f32 %v1354, %v1490
      %v1492 = vpop.f32.mrb[0].mxu0
      %v1493 = vadd.f32 %v1359, %v1492
      %v1494 = vpop.f32.mrb[0].mxu0
      %v1495 = vadd.f32 %v1359, %v1494
      %1496 = vmatprep.mubr.bf16.mxu0 0
      %1497 = vmatmul.mubr.bf16.gmra.mrb[0].mxu0 %v1386
      %v1498 = vpop.f32.mrb[0].mxu0
      %v1499 = vadd.f32 %v1364, %v1498
      %v1500 = vpop.f32.mrb[0].mxu0
      %v1501 = vadd.f32 %v1364, %v1500
      %v1502 = vpop.f32.mrb[0].mxu0
      %v1503 = vadd.f32 %v1369, %v1502
      %v1504 = vpop.f32.mrb[0].mxu0
      %v1505 = vadd.f32 %v1369, %v1504
      %1506 = vdwg.mxu0
      %v1507 = vmax.f32 %v1436, 0.0
      %v1508 = vmax.f32 %v1438, 0.0
      %v1509 = vmax.f32 %v1489, 0.0
      %v1510 = vmax.f32 %v1491, 0.0
      %v1511 = vmax.f32 %v1440, 0.0
      %v1512 = vmax.f32 %v1442, 0.0
      %v1513 = vmax.f32 %v1493, 0.0
      %v1514 = vmax.f32 %v1495, 0.0
      %v1515 = vmax.f32 %v1446, 0.0
      %v1516 = vmax.f32 %v1448, 0.0
      %v1517 = vmax.f32 %v1499, 0.0
      %v1518 = vmax.f32 %v1501, 0.0
      %v1519 = vmax.f32 %v1450, 0.0
      %v1520 = vmax.f32 %v1452, 0.0
      %v1521 = vmax.f32 %v1503, 0.0
      %v1522 = vmax.f32 %v1505, 0.0
      %v1523 = vld [vmem:[%s7] sm:$0xf]
      %v1524 = vpack.c.bf16 %v1511, %v1507
      %v1525 = vpack.c.bf16 %v1512, %v1508
      %v1526 = vpack.c.bf16 %v1513, %v1509
      %v1527 = vpack.c.bf16 %v1514, %v1510
      %v1528 = vpack.c.bf16 %v1519, %v1515
      %v1529 = vpack.c.bf16 %v1520, %v1516
      %v1530 = vpack.c.bf16 %v1521, %v1517
      %v1531 = vpack.c.bf16 %v1522, %v1518
      %v1532 = vld [vmem:[%s8] sm:$0xff]
      %1534 = vset.pattern.permute.xlu0 0
      %1535 = vperm.xlu0 %1534, %v1532
      %v1536 = vpop.permute.xlu0 %1535
      %v1539 = vsel %vm834, %v1523, 0
      %1541 = vmatprep.subr.bf16.mxu0 %v1525
      %1542 = vmatpush1.bf16.msra.mxu0 %v1524
      %1543 = vmatprep.subr.bf16.mxu0 %v1529
      %1544 = vmatpush1.bf16.msra.mxu0 %v1528
      %1545 = vmatprep.subr.bf16.mxu0 0
      %1546 = vmatpush1.bf16.msra.mxu0 0
      %1547 = vmatprep.subr.bf16.mxu0 0
      %1548 = vmatpush1.bf16.msra.mxu0 0
      %1549 = vmatprep.subr.bf16.mxu0 0
      %1550 = vmatpush1.bf16.msra.mxu0 0
      %1551 = vmatprep.subr.bf16.mxu0 0
      %1552 = vmatpush1.bf16.msra.mxu0 0
      %1553 = vmatprep.subr.bf16.mxu0 0
      %1554 = vmatpush1.bf16.msra.mxu0 0
      %1555 = vmatprep.subr.bf16.mxu0 0
      %1556 = vmatpush1.bf16.msra.mxu0 0
      %1557 = vmatprep.subr.bf16.mxu0 0
      %1558 = vmatpush1.bf16.msra.mxu0 0
      %1559 = vmatprep.subr.bf16.mxu0 0
      %1560 = vmatpush1.bf16.msra.mxu0 0
      %1561 = vmatprep.subr.bf16.mxu0 0
      %1562 = vmatpush1.bf16.msra.mxu0 0
      %1563 = vmatprep.subr.bf16.mxu0 0
      %1564 = vmatpush1.bf16.msra.mxu0 0
      %1565 = vmatprep.subr.bf16.mxu0 0
      %1566 = vmatpush1.bf16.msra.mxu0 0
      %1567 = vmatprep.subr.bf16.mxu0 0
      %1568 = vmatpush1.bf16.msra.mxu0 0
      %1569 = vmatprep.subr.bf16.mxu0 0
      %1570 = vmatpush1.bf16.msra.mxu0 0
      %1571 = vmatprep.subr.bf16.mxu0 0
      %1572 = vmatpush1.bf16.msra.mxu0 0
      %1573 = vmatprep.mubr.bf16.mxu0 0
      %1574 = vmatmul.mubr.bf16.gmra.mrb[0].mxu0 %v1539
      %v1575 = vpop.f32.mrb[0].mxu0
      %v1576 = vadd.f32 %v1536, %v1575
      %v1577 = vpop.f32.mrb[0].mxu0
      %v1578 = vadd.f32 %v1536, %v1577
      %v1579 = vpop.f32.mrb[0].mxu0
      %v1580 = vpop.f32.mrb[0].mxu0
      %1581 = vdwg.mxu0
      %1582 = vmatprep.subr.bf16.mxu0 %v1527
      %1583 = vmatpush1.bf16.msra.mxu0 %v1526
      %1584 = vmatprep.subr.bf16.mxu0 %v1531
      %1585 = vmatpush1.bf16.msra.mxu0 %v1530
      %1586 = vmatprep.subr.bf16.mxu0 0
      %1587 = vmatpush1.bf16.msra.mxu0 0
      %1588 = vmatprep.subr.bf16.mxu0 0
      %1589 = vmatpush1.bf16.msra.mxu0 0
      %1590 = vmatprep.subr.bf16.mxu0 0
      %1591 = vmatpush1.bf16.msra.mxu0 0
      %1592 = vmatprep.subr.bf16.mxu0 0
      %1593 = vmatpush1.bf16.msra.mxu0 0
      %1594 = vmatprep.subr.bf16.mxu0 0
      %1595 = vmatpush1.bf16.msra.mxu0 0
      %1596 = vmatprep.subr.bf16.mxu0 0
      %1597 = vmatpush1.bf16.msra.mxu0 0
      %1598 = vmatprep.subr.bf16.mxu0 0
      %1599 = vmatpush1.bf16.msra.mxu0 0
      %1600 = vmatprep.subr.bf16.mxu0 0
      %1601 = vmatpush1.bf16.msra.mxu0 0
      %1602 = vmatprep.subr.bf16.mxu0 0
      %1603 = vmatpush1.bf16.msra.mxu0 0
      %1604 = vmatprep.subr.bf16.mxu0 0
      %1605 = vmatpush1.bf16.msra.mxu0 0
      %1606 = vmatprep.subr.bf16.mxu0 0
      %1607 = vmatpush1.bf16.msra.mxu0 0
      %1608 = vmatprep.subr.bf16.mxu0 0
      %1609 = vmatpush1.bf16.msra.mxu0 0
      %1610 = vmatprep.subr.bf16.mxu0 0
      %1611 = vmatpush1.bf16.msra.mxu0 0
      %1612 = vmatprep.subr.bf16.mxu0 0
      %1613 = vmatpush1.bf16.msra.mxu0 0
      %1614 = vmatprep.mubr.bf16.mxu0 0
      %1615 = vmatmul.mubr.bf16.gmra.mrb[0].mxu0 %v1539
      %v1616 = vpop.f32.mrb[0].mxu0
      %v1617 = vadd.f32 %v1536, %v1616
      %v1618 = vpop.f32.mrb[0].mxu0
      %v1619 = vadd.f32 %v1536, %v1618
      %v1620 = vpop.f32.mrb[0].mxu0
      %v1621 = vpop.f32.mrb[0].mxu0
      %1622 = vdwg.mxu0
      %v1627 = vunpack.c.l.b16 %v1524
      %v1628 = vunpack.c.l.b16 %v1525
      %v1629 = vunpack.c.h.b16 %v1524
      %v1630 = vunpack.c.h.b16 %v1525
      %v1631 = vunpack.c.l.b16 %v1528
      %v1632 = vunpack.c.l.b16 %v1529
      %v1633 = vunpack.c.h.b16 %v1528
      %v1634 = vunpack.c.h.b16 %v1529
      %v1635 = vpack.c.b16 %v1628, %v1627
      %v1636 = vpack.c.b16 %v1630, %v1629
      %v1637 = vpack.c.b16 %v1632, %v1631
      %v1638 = vpack.c.b16 %v1634, %v1633
      %1643 = vst [vmem:[%s417] sm:$0xff] %v1635
      %1644 = vst [vmem:[%s417 + $0x8] sm:$0xff] %v1636
      %1645 = vst [vmem:[%s417 + $0x10] sm:$0xff] %v1637
      %1646 = vst [vmem:[%s417 + $0x18] sm:$0xff] %v1638
      %v1647 = vpack.c.bf16 %v1576, %v1576
      %v1648 = vpack.c.bf16 %v1578, %v1578
      %v1651 = vunpack.c.l.b16 %v1647
      %v1652 = vunpack.c.l.b16 %v1648
      %v1653 = vpack.c.b16 %v1652, %v1651
      %1655 = vst [vmem:[%s424] sm:$0xff] %v1653
      %v1660 = vunpack.c.l.b16 %v1526
      %v1661 = vunpack.c.l.b16 %v1527
      %v1662 = vunpack.c.h.b16 %v1526
      %v1663 = vunpack.c.h.b16 %v1527
      %v1664 = vunpack.c.l.b16 %v1530
      %v1665 = vunpack.c.l.b16 %v1531
      %v1666 = vunpack.c.h.b16 %v1530
      %v1667 = vunpack.c.h.b16 %v1531
      %v1668 = vpack.c.b16 %v1661, %v1660
      %v1669 = vpack.c.b16 %v1663, %v1662
      %v1670 = vpack.c.b16 %v1665, %v1664
      %v1671 = vpack.c.b16 %v1667, %v1666
      %s1676 = scalar_lea.vmem %s417, 32
      %1677 = vst [vmem:[%s1676] sm:$0xff] %v1668
      %1678 = vst [vmem:[%s1676 + $0x8] sm:$0xff] %v1669
      %1679 = vst [vmem:[%s1676 + $0x10] sm:$0xff] %v1670
      %1680 = vst [vmem:[%s1676 + $0x18] sm:$0xff] %v1671
      %v1681 = vpack.c.bf16 %v1617, %v1617
      %v1682 = vpack.c.bf16 %v1619, %v1619
      %v1685 = vunpack.c.l.b16 %v1681
      %v1686 = vunpack.c.l.b16 %v1682
      %v1687 = vpack.c.b16 %v1686, %v1685
      %s1689 = scalar_lea.vmem %s424, 8
      %1690 = vst [vmem:[%s1689] sm:$0xff] %v1687
      %s1691 = smul.u32 2, %s23
      %p1692 = scmp.lt.s32.totalorder %s1691, 3
      %s1693 = scalar_select %p1692, %s1691, 3
      %s1694 = smul.addr %s1693, 2
      %s1695 = smul.addr %s1694, 8
      %s1696 = scalar_lea.vmem %s9, %s1695
      %s1697 = smul.u32 2, %s23
      %p1698 = scmp.lt.s32.totalorder %s1697, 3
      %s1699 = scalar_select %p1698, %s1697, 3
      %s1700 = smul.addr %s1699, 8
      %s1701 = smul.addr %s1700, 4
      %s1702 = scalar_lea.vmem %s10, %s1701
      %s1703 = smul.u32 2, %s23
      %p1704 = scmp.lt.s32.totalorder %s1703, 3
      %s1705 = scalar_select %p1704, %s1703, 3
      %s1706 = smul.addr %s1705, 2
      %s1707 = smul.addr %s1706, 4
      %s1708 = scalar_lea.vmem %s11, %s1707
      // Predicated region
      $region57: #{offline_ae_forward.1} parent=55 // pred_check
        %p1709 = pneg %p235
      $region58: #{offline_ae_forward.1} parent=55 // pred_check_branch
        %1711 = sbr.rel (%p1709) target = $region60
      $region59: #{offline_ae_forward.1} parent=55 // pred_region
        %s1712 = smul.u32 2, %s23
      $region60: #{offline_ae_forward.1} parent=55 // pred_fallthru
        _
      // Predicated region
      $region61: #{offline_ae_forward.1} parent=55 // pred_check
        %p1713 = pneg %p261
      $region62: #{offline_ae_forward.1} parent=55 // pred_check_branch
        %1715 = sbr.rel (%p1713) target = $region64
      $region63: #{offline_ae_forward.1} parent=55 // pred_region
        %s1716 = smul.u32 2, %s23
      $region64: #{offline_ae_forward.1} parent=55 // pred_fallthru
        _
      // Predicated region
      $region65: #{offline_ae_forward.1} parent=55 // pred_check
        %p1717 = pneg %p287
      $region66: #{offline_ae_forward.1} parent=55 // pred_check_branch
        %1719 = sbr.rel (%p1717) target = $region68
      $region67: #{offline_ae_forward.1} parent=55 // pred_region
        %s1720 = smul.u32 2, %s23
      $region68: #{offline_ae_forward.1} parent=55 // pred_fallthru
        _
    $region56: #{offline_ae_forward.1} parent=5 // pred_fallthru
      _
    %p1721 = scmp.le.s32.totalorder 2, %s18
    // Predicated region
    $region69: #{offline_ae_forward.1} parent=5 // pred_check
      %p1722 = pneg %p1721
    $region70: #{offline_ae_forward.1} parent=5 // pred_check_branch
      %1724 = sbr.rel (%p1722) target = $region72
    $region71: #{offline_ae_forward.1} parent=5 // pred_region
      %s1725 = ssub.s32 %s18, 2
      // Predicated region
      $region73: #{offline_ae_forward.1} parent=71 // pred_check
        %p1726 = pneg %p241
      $region74: #{offline_ae_forward.1} parent=71 // pred_check_branch
        %1728 = sbr.rel (%p1726) target = $region76
      $region75: #{offline_ae_forward.1} parent=71 // pred_region
        %s1729 = smul.u32 2, %s24
        %p1730 = scmp.lt.s32.totalorder %s1729, 3
        %s1731 = scalar_select %p1730, %s1729, 3
        %s1732 = smul.addr %s1731, 2
        %s1733 = smul.addr %s1732, 8
        %s1734 = scalar_lea.vmem %s9, %s1733
      $region76: #{offline_ae_forward.1} parent=71 // pred_fallthru
        _
      // Predicated region
      $region77: #{offline_ae_forward.1} parent=71 // pred_check
        %p1735 = pneg %p267
      $region78: #{offline_ae_forward.1} parent=71 // pred_check_branch
        %1737 = sbr.rel (%p1735) target = $region80
      $region79: #{offline_ae_forward.1} parent=71 // pred_region
        %s1738 = smul.u32 2, %s24
        %p1739 = scmp.lt.s32.totalorder %s1738, 3
        %s1740 = scalar_select %p1739, %s1738, 3
        %s1741 = smul.addr %s1740, 8
        %s1742 = smul.addr %s1741, 4
        %s1743 = scalar_lea.vmem %s10, %s1742
      $region80: #{offline_ae_forward.1} parent=71 // pred_fallthru
        _
      // Predicated region
      $region81: #{offline_ae_forward.1} parent=71 // pred_check
        %p1744 = pneg %p293
      $region82: #{offline_ae_forward.1} parent=71 // pred_check_branch
        %1746 = sbr.rel (%p1744) target = $region84
      $region83: #{offline_ae_forward.1} parent=71 // pred_region
        %s1747 = smul.u32 2, %s24
        %p1748 = scmp.lt.s32.totalorder %s1747, 3
        %s1749 = scalar_select %p1748, %s1747, 3
        %s1750 = smul.addr %s1749, 2
        %s1751 = smul.addr %s1750, 4
        %s1752 = scalar_lea.vmem %s11, %s1751
      $region84: #{offline_ae_forward.1} parent=71 // pred_fallthru
        _
    $region72: #{offline_ae_forward.1} parent=5 // pred_fallthru
      _
  $region6: #{offline_ae_forward.1} parent=0 // loop_footer
    %s22 = sadd.s32 1, %s18
  $region7: #{offline_ae_forward.1} parent=0 // loop_footer_branch
    %17 = sbr.rel target = $region3
  $region8: #{offline_ae_forward.1} parent=0 // loop_exit
    _

</llo_original>
